<compile_context>
chip_gen: v7x
topology: tpu7x:2x2x1
jax: 0.10.0
libtpu: 0.0.40
codegen_flags: <defaults>
</compile_context>

<pallas_src>
import jax
import jax.numpy as jnp
from jax.experimental import pallas as pl
from jax.experimental.pallas import tpu as pltpu


NEG_INF = -1e30  # finite "minus infinity" for the online-LSE running max


# ---------------------------------------------------------------------------
# Pallas kernel: decoder head + online log-softmax + label-logit gather
# ---------------------------------------------------------------------------
def score_kernel(x_ref, wh_ref, wout_ref, labels_ref, out_ref,
                 h_scr, m_scr, l_scr, tok_scr):
    # x_ref:      (H, TR)   bf16  decoder input hidden states (rows on lanes)
    # wh_ref:     (H, H)    bf16  decoder hidden weight (transposed)
    # wout_ref:   (TV, H)   bf16  vocab-projection tile (transposed)
    # labels_ref: (1, TR)   int32 target token ids
    # out_ref:    (1, TR)   f32   per-token log-prob of the label token
    # h_scr:      (H, TR)   bf16  hidden activations (reused across vocab tiles)
    # m_scr/l_scr/tok_scr: (1, TR) f32 online-LSE running max / sum / label logit
    v = pl.program_id(1)
    nv = pl.num_programs(1)
    tv = wout_ref.shape[0]

    @pl.when(v == 0)
    def _init():
        # First matmul + tanh once per row tile; init online-LSE accumulators.
        h = jnp.tanh(jnp.dot(wh_ref[...], x_ref[...],
                             preferred_element_type=jnp.float32))
        h_scr[...] = h.astype(h_scr.dtype)
        m_scr[...] = jnp.full_like(m_scr, NEG_INF)
        l_scr[...] = jnp.zeros_like(l_scr)
        tok_scr[...] = jnp.zeros_like(tok_scr)

    # logits tile: (TV, TR) = wout_tile (TV, H) @ h (H, TR), f32 accumulation
    logits = jnp.dot(wout_ref[...], h_scr[...],
                     preferred_element_type=jnp.float32)

    # online log-sum-exp over the vocab axis (sublane axis 0)
    m_prev = m_scr[...]
    m_new = jnp.maximum(m_prev, jnp.max(logits, axis=0, keepdims=True))
    l_scr[...] = (l_scr[...] * jnp.exp(m_prev - m_new)
                  + jnp.sum(jnp.exp(logits - m_new), axis=0, keepdims=True))
    m_scr[...] = m_new

    # gather the label logit (exactly one vocab tile contains each label id)
    vocab_ids = jax.lax.broadcasted_iota(jnp.int32, logits.shape, 0) + v * tv
    onehot = (vocab_ids == labels_ref[...]).astype(jnp.float32)
    tok_scr[...] += jnp.sum(logits * onehot, axis=0, keepdims=True)

    @pl.when(v == nv - 1)
    def _finalize():
        out_ref[...] = tok_scr[...] - m_scr[...] - jnp.log(l_scr[...])


def _pick_vocab_tile(v):
    if v <= 512:
        return v                       # single tile; block == full dim is legal
    for c in (512, 256, 128, 64, 32, 16, 8):
        if v % c == 0:
            return c
    return v                           # fallback: one big tile


def pallas_seq_token_log_probs(dec_in_2d, w_h, w_out, labels_flat):
    """Per-token log P(label | context) for every token, shape (B*L,)."""
    n, h = dec_in_2d.shape
    v = w_out.shape[1]

    tr = 128                                    # row (token) tile, lane axis
    n_pad = ((n + tr - 1) // tr) * tr
    tv = _pick_vocab_tile(v)
    assert v % tv == 0

    # lane-dense transposed layouts, bf16 for MXU inputs
    x_t = jnp.pad(dec_in_2d.astype(jnp.bfloat16).T, ((0, 0), (0, n_pad - n)))
    wh_t = w_h.T.astype(jnp.bfloat16)           # (H, H)
    wout_t = w_out.T.astype(jnp.bfloat16)       # (V, H)
    labels_row = jnp.pad(labels_flat.astype(jnp.int32),
                         (0, n_pad - n)).reshape(1, n_pad)

    n_row_tiles = n_pad // tr
    n_vocab_tiles = v // tv

    grid_spec = pltpu.PrefetchScalarGridSpec(
        num_scalar_prefetch=0,
        grid=(n_row_tiles, n_vocab_tiles),
        in_specs=[
            pl.BlockSpec((h, tr), lambda r, c: (0, r)),    # x: resident over vocab
            pl.BlockSpec((h, h), lambda r, c: (0, 0)),     # w_h: fetched once
            pl.BlockSpec((tv, h), lambda r, c: (c, 0)),    # w_out: streamed over V
            pl.BlockSpec((1, tr), lambda r, c: (0, r)),    # labels
        ],
        out_specs=pl.BlockSpec((1, tr), lambda r, c: (0, r)),  # resident over V
        scratch_shapes=[
            pltpu.VMEM((h, tr), jnp.bfloat16),   # hidden activations
            pltpu.VMEM((1, tr), jnp.float32),    # running max
            pltpu.VMEM((1, tr), jnp.float32),    # running sum
            pltpu.VMEM((1, tr), jnp.float32),    # label logit
        ],
    )

    out = pl.pallas_call(
        score_kernel,
        out_shape=jax.ShapeDtypeStruct((1, n_pad), jnp.float32),
        grid_spec=grid_spec,
        compiler_params=pltpu.CompilerParams(
            dimension_semantics=("parallel", "arbitrary"),
            vmem_limit_bytes=48 * 1024 * 1024,
        ),
    )(x_t, wh_t, wout_t, labels_row)
    return out[0, :n]


# ---------------------------------------------------------------------------
# Synthetic encoder-decoder "model" glue (plain JAX)
# ---------------------------------------------------------------------------
def encoder_decoder_forward(params, batch, n_targets):
    emb, w_h, w_out = params["emb"], params["w_h"], params["w_out"]
    input_ids = batch["input_ids"]                           # (B, Lin)
    attention_mask = batch["attention_mask"]                 # (B, Lin)
    labels = batch["labels"]                                 # (B, Llab)
    labels_attention_mask = batch["labels_attention_mask"]   # (B, Llab)

    b, llab = labels.shape

    # ---- synthetic encoder: masked mean pool of token embeddings ----
    enc_emb = emb[input_ids]                                             # (B, Lin, H)
    enc_m = attention_mask.astype(jnp.float32)[:, :, None]
    ctx = (enc_emb * enc_m).sum(axis=1) / jnp.maximum(enc_m.sum(axis=1), 1.0)

    # ---- synthetic decoder input: label embedding + encoder context ----
    dec_in = emb[labels] + ctx[:, None, :]                               # (B, Llab, H)

    dec_in_2d = dec_in.reshape(b * llab, -1)
    labels_flat = labels.reshape(b * llab)

    # ---- Pallas hot path: per-token log-prob of each label token ----
    tok_logp = pallas_seq_token_log_probs(dec_in_2d, w_h, w_out, labels_flat)
    tok_logp = tok_logp.reshape(b, llab)

    # ---- masked per-sequence sum + view/argmax (matches the torch module) ----
    seq_log_prob = (tok_logp * labels_attention_mask.astype(jnp.float32)).sum(-1)
    seq_log_prob = seq_log_prob.reshape(n_targets, -1)
    predictions = jnp.argmax(seq_log_prob, axis=-1)
    return predictions, seq_log_prob


# ---------------------------------------------------------------------------
# Pure-JAX reference (mirrors the torch forward on the same synthetic model,
# with the same bf16 operand rounding / f32 accumulation as the kernel)
# ---------------------------------------------------------------------------
def reference_forward(params, batch, n_targets):
    emb, w_h, w_out = params["emb"], params["w_h"], params["w_out"]
    input_ids = batch["input_ids"]
    attention_mask = batch["attention_mask"]
    labels = batch["labels"]
    labels_attention_mask = batch["labels_attention_mask"]

    enc_emb = emb[input_ids]
    enc_m = attention_mask.astype(jnp.float32)[:, :, None]
    ctx = (enc_emb * enc_m).sum(axis=1) / jnp.maximum(enc_m.sum(axis=1), 1.0)
    dec_in = emb[labels] + ctx[:, None, :]

    dec_in_bf = dec_in.astype(jnp.bfloat16)
    wh_bf = w_h.astype(jnp.bfloat16)
    wout_bf = w_out.astype(jnp.bfloat16)

    h = jnp.tanh(jnp.einsum("blh,hk->blk", dec_in_bf, wh_bf,
                            preferred_element_type=jnp.float32))
    logits = jnp.einsum("blk,kv->blv", h.astype(jnp.bfloat16), wout_bf,
                        preferred_element_type=jnp.float32)              # (B, L, V)

    masked_log_probs = labels_attention_mask[..., None].astype(jnp.float32) * \
        jax.nn.log_softmax(logits, axis=-1)
    seq_token_log_probs = jnp.take_along_axis(masked_log_probs,
                                              labels[..., None], axis=-1)
    seq_log_prob = seq_token_log_probs[..., 0].sum(axis=-1)
    seq_log_prob = seq_log_prob.reshape(n_targets, -1)
    predictions = jnp.argmax(seq_log_prob, axis=-1)
    return predictions, seq_log_prob


# ---------------------------------------------------------------------------
if __name__ == "__main__":
    # 4 targets x 2 candidate options = batch 8; shapes are MXU-friendly:
    # H = 128 (full contraction dim), V = 1024 (2 vocab tiles of 512),
    # B*L = 256 (2 row tiles of 128) -> exercises both grid axes.
    n_targets, num_options = 4, 2
    B = n_targets * num_options
    L_in, L_lab = 16, 32
    H, V = 128, 1024

    key = jax.random.PRNGKey(0)
    k_emb, k_wh, k_wout, k_in, k_lab = jax.random.split(key, 5)

    params = {
        "emb":   jax.random.normal(k_emb,  (V, H), jnp.float32) * 0.05,
        "w_h":   jax.random.normal(k_wh,   (H, H), jnp.float32) * 0.1,
        "w_out": jax.random.normal(k_wout, (H, V), jnp.float32) * 0.1,
    }

    labels_attention_mask = jnp.ones((B, L_lab), jnp.int32).at[:, -4:].set(0)
    batch = {
        "input_ids": jax.random.randint(k_in, (B, L_in), 0, V, dtype=jnp.int32),
        "attention_mask": jnp.ones((B, L_in), jnp.int32),
        "labels": jax.random.randint(k_lab, (B, L_lab), 0, V, dtype=jnp.int32),
        "labels_attention_mask": labels_attention_mask,
        "targets": jnp.zeros((n_targets,), jnp.int32),
    }

    preds, seq_log_prob = encoder_decoder_forward(params, batch, n_targets)
    jax.block_until_ready((preds, seq_log_prob))

    ref_preds, ref_seq_log_prob = reference_forward(params, batch, n_targets)
    assert seq_log_prob.shape == (n_targets, num_options)
    assert jnp.allclose(seq_log_prob, ref_seq_log_prob, rtol=1e-4, atol=1e-3), \
        (seq_log_prob, ref_seq_log_prob)
    assert jnp.array_equal(preds, ref_preds), (preds, ref_preds)

    print("KERNEL_OK")
</pallas_src>

<mosaic_0001>
module attributes {stable_mosaic.version = 11 : i64} {
  func.func @score_kernel(%arg0: i32, %arg1: i32, %arg2: memref<128x128xbf16, #tpu.memory_space<vmem>>, %arg3: memref<128x128xbf16, #tpu.memory_space<vmem>>, %arg4: memref<512x128xbf16, #tpu.memory_space<vmem>>, %arg5: memref<1x128xi32, #tpu.memory_space<vmem>>, %arg6: memref<1x128xf32, #tpu.memory_space<vmem>>, %arg7: memref<128x128xbf16, #tpu.memory_space<vmem>>, %arg8: memref<1x128xf32, #tpu.memory_space<vmem>>, %arg9: memref<1x128xf32, #tpu.memory_space<vmem>>, %arg10: memref<1x128xf32, #tpu.memory_space<vmem>>) attributes {dimension_semantics = [#tpu.dimension_semantics<parallel>, #tpu.dimension_semantics<arbitrary>], iteration_bounds = array<i64: 2, 2>, scalar_prefetch = 0 : i64, scratch_operands = 4 : i64, tpu.core_type = #tpu.core_type<tc>, window_params = [{transform_indices = @transform_0, window_bounds = array<i64: 128, 128>}, {pipeline_mode = #tpu.pipeline_mode<synchronous>, transform_indices = @transform_1, window_bounds = array<i64: 128, 128>}, {transform_indices = @transform_2, window_bounds = array<i64: 512, 128>}, {transform_indices = @transform_3, window_bounds = array<i64: 1, 128>}, {transform_indices = @transform_4, window_bounds = array<i64: 1, 128>}]} {
    %c0_i32 = arith.constant 0 : i32
    %0 = arith.cmpi eq, %arg1, %c0_i32 : i32
    %1 = arith.extui %0 : i1 to i32
    %c0_i32_0 = arith.constant 0 : i32
    %2 = arith.cmpi ne, %1, %c0_i32_0 : i32
    scf.if %2 {
      %c0_22 = arith.constant 0 : index
      %c0_23 = arith.constant 0 : index
      %40 = vector.load %arg3[%c0_22, %c0_23] : memref<128x128xbf16, #tpu.memory_space<vmem>>, vector<128x128xbf16>
      %c0_24 = arith.constant 0 : index
      %c0_25 = arith.constant 0 : index
      %41 = vector.load %arg2[%c0_24, %c0_25] : memref<128x128xbf16, #tpu.memory_space<vmem>>, vector<128x128xbf16>
      %cst_26 = arith.constant dense<0.000000e+00> : vector<128x128xf32>
      %42 = tpu.matmul %40, %41, %cst_26 {dimension_numbers = #tpu.dot_dimension_numbers<[1], [0], [0], [1], [0, 0, 1, 1], [], []>} : vector<128x128xbf16>, vector<128x128xbf16>, vector<128x128xf32> -> vector<128x128xf32>
      %43 = math.tanh %42 : vector<128x128xf32>
      %44 = arith.truncf %43 : vector<128x128xf32> to vector<128x128xbf16>
      %c0_27 = arith.constant 0 : index
      %c0_28 = arith.constant 0 : index
      %45 = vector.load %arg7[%c0_27, %c0_28] : memref<128x128xbf16, #tpu.memory_space<vmem>>, vector<128x128xbf16>
      tpu.vector_store %arg7[%c0_27, %c0_28], %44 {strides = array<i32>} : memref<128x128xbf16, #tpu.memory_space<vmem>>, vector<128x128xbf16>,
      %cst_29 = arith.constant -1.000000e+30 : f32
      %46 = vector.broadcast %cst_29 : f32 to vector<1x128xf32>
      %c0_30 = arith.constant 0 : index
      %c0_31 = arith.constant 0 : index
      %47 = vector.load %arg8[%c0_30, %c0_31] : memref<1x128xf32, #tpu.memory_space<vmem>>, vector<1x128xf32>
      tpu.vector_store %arg8[%c0_30, %c0_31], %46 {strides = array<i32>} : memref<1x128xf32, #tpu.memory_space<vmem>>, vector<1x128xf32>,
      %cst_32 = arith.constant 0.000000e+00 : f32
      %48 = vector.broadcast %cst_32 : f32 to vector<1x128xf32>
      %c0_33 = arith.constant 0 : index
      %c0_34 = arith.constant 0 : index
      %49 = vector.load %arg9[%c0_33, %c0_34] : memref<1x128xf32, #tpu.memory_space<vmem>>, vector<1x128xf32>
      tpu.vector_store %arg9[%c0_33, %c0_34], %48 {strides = array<i32>} : memref<1x128xf32, #tpu.memory_space<vmem>>, vector<1x128xf32>,
      %cst_35 = arith.constant 0.000000e+00 : f32
      %50 = vector.broadcast %cst_35 : f32 to vector<1x128xf32>
      %c0_36 = arith.constant 0 : index
      %c0_37 = arith.constant 0 : index
      %51 = vector.load %arg10[%c0_36, %c0_37] : memref<1x128xf32, #tpu.memory_space<vmem>>, vector<1x128xf32>
      tpu.vector_store %arg10[%c0_36, %c0_37], %50 {strides = array<i32>} : memref<1x128xf32, #tpu.memory_space<vmem>>, vector<1x128xf32>,
    } else {
    }
    %c0 = arith.constant 0 : index
    %c0_1 = arith.constant 0 : index
    %3 = vector.load %arg4[%c0, %c0_1] : memref<512x128xbf16, #tpu.memory_space<vmem>>, vector<512x128xbf16>
    %c0_2 = arith.constant 0 : index
    %c0_3 = arith.constant 0 : index
    %4 = vector.load %arg7[%c0_2, %c0_3] : memref<128x128xbf16, #tpu.memory_space<vmem>>, vector<128x128xbf16>
    %cst = arith.constant dense<0.000000e+00> : vector<512x128xf32>
    %5 = tpu.matmul %3, %4, %cst {dimension_numbers = #tpu.dot_dimension_numbers<[1], [0], [0], [1], [0, 0, 1, 1], [], []>} : vector<512x128xbf16>, vector<128x128xbf16>, vector<512x128xf32> -> vector<512x128xf32>
    %c0_4 = arith.constant 0 : index
    %c0_5 = arith.constant 0 : index
    %6 = vector.load %arg8[%c0_4, %c0_5] : memref<1x128xf32, #tpu.memory_space<vmem>>, vector<1x128xf32>
    %cst_6 = arith.constant dense<0xFF800000> : vector<128xf32>
    %7 = vector.multi_reduction <maximumf>, %5, %cst_6 [0] : vector<512x128xf32> to vector<128xf32>
    %8 = vector.shape_cast %7 : vector<128xf32> to vector<1x128xf32>
    %9 = arith.maximumf %6, %8 : vector<1x128xf32>
    %c0_7 = arith.constant 0 : index
    %c0_8 = arith.constant 0 : index
    %10 = vector.load %arg9[%c0_7, %c0_8] : memref<1x128xf32, #tpu.memory_space<vmem>>, vector<1x128xf32>
    %11 = arith.subf %6, %9 : vector<1x128xf32>
    %12 = math.exp %11 : vector<1x128xf32>
    %13 = arith.mulf %10, %12 : vector<1x128xf32>
    %14 = vector.broadcast %9 : vector<1x128xf32> to vector<512x128xf32>
    %15 = arith.subf %5, %14 : vector<512x128xf32>
    %16 = math.exp %15 : vector<512x128xf32>
    %cst_9 = arith.constant dense<0.000000e+00> : vector<128xf32>
    %17 = vector.multi_reduction <add>, %16, %cst_9 [0] : vector<512x128xf32> to vector<128xf32>
    %18 = vector.shape_cast %17 : vector<128xf32> to vector<1x128xf32>
    %19 = arith.addf %13, %18 : vector<1x128xf32>
    %c0_10 = arith.constant 0 : index
    %c0_11 = arith.constant 0 : index
    %20 = vector.load %arg9[%c0_10, %c0_11] : memref<1x128xf32, #tpu.memory_space<vmem>>, vector<1x128xf32>
    tpu.vector_store %arg9[%c0_10, %c0_11], %19 {strides = array<i32>} : memref<1x128xf32, #tpu.memory_space<vmem>>, vector<1x128xf32>,
    %c0_12 = arith.constant 0 : index
    %c0_13 = arith.constant 0 : index
    %21 = vector.load %arg8[%c0_12, %c0_13] : memref<1x128xf32, #tpu.memory_space<vmem>>, vector<1x128xf32>
    tpu.vector_store %arg8[%c0_12, %c0_13], %9 {strides = array<i32>} : memref<1x128xf32, #tpu.memory_space<vmem>>, vector<1x128xf32>,
    %22 = tpu.iota {dimensions = array<i32: 0>} : vector<512x128xi32>
    %c512_i32 = arith.constant 512 : i32
    %23 = arith.muli %arg1, %c512_i32 : i32
    %24 = vector.broadcast %23 : i32 to vector<512x128xi32>
    %25 = arith.addi %22, %24 : vector<512x128xi32>
    %c0_14 = arith.constant 0 : index
    %c0_15 = arith.constant 0 : index
    %26 = vector.load %arg5[%c0_14, %c0_15] : memref<1x128xi32, #tpu.memory_space<vmem>>, vector<1x128xi32>
    %27 = vector.broadcast %26 : vector<1x128xi32> to vector<512x128xi32>
    %28 = arith.cmpi eq, %25, %27 : vector<512x128xi32>
    %29 = arith.extui %28 : vector<512x128xi1> to vector<512x128xi32>
    %30 = arith.sitofp %29 : vector<512x128xi32> to vector<512x128xf32>
    %c0_16 = arith.constant 0 : index
    %c0_17 = arith.constant 0 : index
    %31 = vector.load %arg10[%c0_16, %c0_17] : memref<1x128xf32, #tpu.memory_space<vmem>>, vector<1x128xf32>
    %32 = arith.mulf %5, %30 : vector<512x128xf32>
    %cst_18 = arith.constant dense<0.000000e+00> : vector<128xf32>
    %33 = vector.multi_reduction <add>, %32, %cst_18 [0] : vector<512x128xf32> to vector<128xf32>
    %34 = vector.shape_cast %33 : vector<128xf32> to vector<1x128xf32>
    %35 = arith.addf %31, %34 : vector<1x128xf32>
    %c0_19 = arith.constant 0 : index
    %c0_20 = arith.constant 0 : index
    %36 = vector.load %arg10[%c0_19, %c0_20] : memref<1x128xf32, #tpu.memory_space<vmem>>, vector<1x128xf32>
    tpu.vector_store %arg10[%c0_19, %c0_20], %35 {strides = array<i32>} : memref<1x128xf32, #tpu.memory_space<vmem>>, vector<1x128xf32>,
    %c1_i32 = arith.constant 1 : i32
    %37 = arith.cmpi eq, %arg1, %c1_i32 : i32
    %38 = arith.extui %37 : i1 to i32
    %c0_i32_21 = arith.constant 0 : i32
    %39 = arith.cmpi ne, %38, %c0_i32_21 : i32
    scf.if %39 {
      %c0_22 = arith.constant 0 : index
      %c0_23 = arith.constant 0 : index
      %40 = vector.load %arg10[%c0_22, %c0_23] : memref<1x128xf32, #tpu.memory_space<vmem>>, vector<1x128xf32>
      %c0_24 = arith.constant 0 : index
      %c0_25 = arith.constant 0 : index
      %41 = vector.load %arg8[%c0_24, %c0_25] : memref<1x128xf32, #tpu.memory_space<vmem>>, vector<1x128xf32>
      %42 = arith.subf %40, %41 : vector<1x128xf32>
      %c0_26 = arith.constant 0 : index
      %c0_27 = arith.constant 0 : index
      %43 = vector.load %arg9[%c0_26, %c0_27] : memref<1x128xf32, #tpu.memory_space<vmem>>, vector<1x128xf32>
      %44 = math.log %43 : vector<1x128xf32>
      %45 = arith.subf %42, %44 : vector<1x128xf32>
      %c0_28 = arith.constant 0 : index
      %c0_29 = arith.constant 0 : index
      %46 = vector.load %arg6[%c0_28, %c0_29] : memref<1x128xf32, #tpu.memory_space<vmem>>, vector<1x128xf32>
      tpu.vector_store %arg6[%c0_28, %c0_29], %45 {strides = array<i32>} : memref<1x128xf32, #tpu.memory_space<vmem>>, vector<1x128xf32>,
    } else {
    }
    return
  }
  func.func @transform_0(%arg0: i32, %arg1: i32) -> (i32, i32) {
    %c0_i32 = arith.constant 0 : i32
    %c0_i32_0 = arith.constant 0 : i32
    return %c0_i32, %arg0 : i32, i32
  }
  func.func @transform_1(%arg0: i32, %arg1: i32) -> (i32, i32) {
    %c0_i32 = arith.constant 0 : i32
    %c0_i32_0 = arith.constant 0 : i32
    %c0_i32_1 = arith.constant 0 : i32
    return %c0_i32, %c0_i32_0 : i32, i32
  }
  func.func @transform_2(%arg0: i32, %arg1: i32) -> (i32, i32) {
    %c0_i32 = arith.constant 0 : i32
    %c0_i32_0 = arith.constant 0 : i32
    return %arg1, %c0_i32 : i32, i32
  }
  func.func @transform_3(%arg0: i32, %arg1: i32) -> (i32, i32) {
    %c0_i32 = arith.constant 0 : i32
    %c0_i32_0 = arith.constant 0 : i32
    return %c0_i32, %arg0 : i32, i32
  }
  func.func @transform_4(%arg0: i32, %arg1: i32) -> (i32, i32) {
    %c0_i32 = arith.constant 0 : i32
    %c0_i32_0 = arith.constant 0 : i32
    return %c0_i32, %arg0 : i32, i32
  }
}

</mosaic_0001>

<llo_original>
// kernel: tpu_custom_call.1
$region0: #{tpu_custom_call.1}
  #allocation0 [shape = 'u32[]', space=smem, size = 0x4, offset = 0x4, fixed_abs, tag = 'smem constant byte address 0x4 - core index']
  #allocation1 [shape = 'u32[144,128]{1,0:T(1,128)}', space=vmem, size = 0x12000, scoped, tag = 'internal scratch']
  #allocation2 [shape = 'bf16[128,128]{1,0:T(16,128)(2,1)}', space=vmem, size = 0x8000, scoped, tag = 'scratch operand']
  #allocation3 [shape = 'f32[1,128]{1,0:T(1,128)}', space=vmem, size = 0x200, scoped, tag = 'scratch operand']
  #allocation4 [shape = 'f32[1,128]{1,0:T(1,128)}', space=vmem, size = 0x200, scoped, tag = 'scratch operand']
  #allocation5 [shape = 'f32[1,128]{1,0:T(1,128)}', space=vmem, size = 0x200, scoped, tag = 'scratch operand']
  %s0 = inlined_call_operand.hbm [shape: bf16[128,256], index: 0, kind: input, shape index: {}]
  %s1 = inlined_call_operand.hbm [shape: bf16[128,128], index: 1, kind: input, shape index: {}]
  %s2 = inlined_call_operand.hbm [shape: bf16[1024,128], index: 2, kind: input, shape index: {}]
  %s3 = inlined_call_operand.vmem [shape: s32[1,256], index: 3, kind: input, shape index: {}]
  %s4 = inlined_call_operand.hbm [shape: f32[1,256], index: 4, kind: output, shape index: {}]
  %s5 = sld [smem:[#allocation0]]
  $region69: #{tpu_custom_call.1} parent=0
    _
  %s7 = ssub.s32 1, %s5
  %s8 = scalar_select 0, %s7, %s5
  $region1: #{tpu_custom_call.1} parent=0
    #allocation6 [shape = 'u8[65536]{0}', space=vmem, size = 0x10000, scoped, tag = 'input window, operand 0']
    #allocation7 [shape = 's32[2]{0}', space=sflag, size = 0x8, scoped, tag = 'scoped memory for tpu_custom_call.1']
    #allocation8 [shape = 's32[2]{0}', space=sflag, size = 0x8, scoped, tag = 'scoped memory for tpu_custom_call.1']
    #allocation9 [shape = 'u8[32768]{0}', space=vmem, size = 0x8000, scoped, tag = 'input window, operand 1, single buffered']
    #allocation10 [shape = 's32[1]{0}', space=sflag, size = 0x4, scoped, tag = 'scoped memory for tpu_custom_call.1']
    #allocation11 [shape = 'u8[262144]{0}', space=vmem, size = 0x40000, scoped, tag = 'input window, operand 2']
    #allocation12 [shape = 'u8[1024]{0}', space=vmem, size = 0x400, scoped, tag = 'output window, operand 0']
    %9 = vsyncpa [#allocation7], 0
    %s10 = scalar_lea.sflag [#allocation7], 1
    %11 = vsyncpa %s10, 0
    %12 = vsyncpa [#allocation10], 0
    %13 = vsyncpa [#allocation8], 0
    %s14 = scalar_lea.sflag [#allocation8], 1
    %15 = vsyncpa %s14, 0
    loop: start=0, step=1, limit=6
    $region2: #{tpu_custom_call.1} parent=1 // loop_pre_header
      _
    $region3: #{tpu_custom_call.1} parent=1 // loop_header
      %s17 = sphi 0, %s21
      %p18 = scmp.ge.s32.totalorder %s17, 6
      %s24 = sphi 0, %s36
      %s25 = sphi 0, %s32
      %s26 = sphi 0, %s24
      %s27 = sphi 0, %s25
      %s28 = sphi 0, %s26
      %s29 = sphi 0, %s27
      %s39 = sphi 0, %s41
      %s42 = sphi 0, %s39
      %s43 = sphi 0, %s42
      %s59 = sphi 0, %s43
      %s63 = sphi 0, %s63
      %s65 = sphi 0, %s63
      %s66 = sphi 0, %s65
      %s80 = sphi 0, %s66
      %s86 = sphi 0, %s88
      %s89 = sphi 0, %s86
      %s90 = sphi 0, %s89
      %s106 = sphi 0, %s90
      %s112 = sphi 0, %s114
      %s115 = sphi 0, %s112
      %s116 = sphi 0, %s115
      %s132 = sphi 0, %s116
      %s138 = sphi 0, %s140
      %s141 = sphi 0, %s138
      %s142 = sphi 0, %s141
      %s158 = sphi 0, %s142
    $region4: #{tpu_custom_call.1} parent=1 // loop_header_branch
      %20 = sbr.rel (%p18) target = $region8
    $region5: #{tpu_custom_call.1} parent=1 // loop_body
      %s22 = ssub.s32 %s17, 1
      %s23 = ssub.s32 %s17, 2
      %s30 = sadd.s32 1, %s25
      %p31 = scmp.ge.s32.totalorder %s30, 2
      %s32 = scalar_select %p31, 0, %s30
      %s33 = sadd.s32 1, %s24
      %s34 = scalar_select %p31, %s33, %s24
      %p35 = scmp.ge.s32.totalorder %s34, 2
      %s36 = scalar_select %p35, 0, %s34
      %s37 = ssub.s32 %s24, %s36
      %p38 = scmp.eq.s32.totalorder %s37, 0
      %s40 = sadd.s32 %s39, 1
      %s41 = scalar_select %p38, %s39, %s40
      %p44 = pneg %p38
      %p45 = scmp.eq.s32.totalorder %s17, 3
      %p46 = por %p44, %p45
      %p47 = scmp.ne.s32.totalorder %s39, %s42
      %p48 = scmp.eq.s32.totalorder %s17, 0
      %p49 = por %p47, %p48
      %p50 = scmp.ne.s32.totalorder %s39, %s42
      %p51 = scmp.eq.s32.totalorder %s22, 3
      %p52 = por %p50, %p51
      %p53 = scmp.ne.s32.totalorder %s42, %s43
      %p54 = scmp.eq.s32.totalorder %s22, 0
      %p55 = por %p53, %p54
      %p56 = scmp.ne.s32.totalorder %s42, %s43
      %p57 = scmp.eq.s32.totalorder %s23, 3
      %p58 = por %p56, %p57
      %p60 = scmp.ne.s32.totalorder %s43, %s59
      %p61 = scmp.eq.s32.totalorder %s23, 0
      %p62 = por %p60, %p61
      %s64 = sadd.s32 %s63, 1
      %p67 = scmp.eq.s32.totalorder %s17, 3
      %p68 = scmp.ne.s32.totalorder %s63, %s65
      %p69 = scmp.eq.s32.totalorder %s17, 0
      %p70 = por %p68, %p69
      %p71 = scmp.ne.s32.totalorder %s63, %s65
      %p72 = scmp.eq.s32.totalorder %s22, 3
      %p73 = por %p71, %p72
      %p74 = scmp.ne.s32.totalorder %s65, %s66
      %p75 = scmp.eq.s32.totalorder %s22, 0
      %p76 = por %p74, %p75
      %p77 = scmp.ne.s32.totalorder %s65, %s66
      %p78 = scmp.eq.s32.totalorder %s23, 3
      %p79 = por %p77, %p78
      %p81 = scmp.ne.s32.totalorder %s66, %s80
      %p82 = scmp.eq.s32.totalorder %s23, 0
      %p83 = por %p81, %p82
      %s84 = ssub.s32 %s25, %s32
      %p85 = scmp.eq.s32.totalorder %s84, 0
      %s87 = sadd.s32 %s86, 1
      %s88 = scalar_select %p85, %s86, %s87
      %p91 = pneg %p85
      %p92 = scmp.eq.s32.totalorder %s17, 3
      %p93 = por %p91, %p92
      %p94 = scmp.ne.s32.totalorder %s86, %s89
      %p95 = scmp.eq.s32.totalorder %s17, 0
      %p96 = por %p94, %p95
      %p97 = scmp.ne.s32.totalorder %s86, %s89
      %p98 = scmp.eq.s32.totalorder %s22, 3
      %p99 = por %p97, %p98
      %p100 = scmp.ne.s32.totalorder %s89, %s90
      %p101 = scmp.eq.s32.totalorder %s22, 0
      %p102 = por %p100, %p101
      %p103 = scmp.ne.s32.totalorder %s89, %s90
      %p104 = scmp.eq.s32.totalorder %s23, 3
      %p105 = por %p103, %p104
      %p107 = scmp.ne.s32.totalorder %s90, %s106
      %p108 = scmp.eq.s32.totalorder %s23, 0
      %p109 = por %p107, %p108
      %s110 = ssub.s32 %s24, %s36
      %p111 = scmp.eq.s32.totalorder %s110, 0
      %s113 = sadd.s32 %s112, 1
      %s114 = scalar_select %p111, %s112, %s113
      %p117 = pneg %p111
      %p118 = scmp.eq.s32.totalorder %s17, 3
      %p119 = por %p117, %p118
      %p120 = scmp.ne.s32.totalorder %s112, %s115
      %p121 = scmp.eq.s32.totalorder %s17, 0
      %p122 = por %p120, %p121
      %p123 = scmp.ne.s32.totalorder %s112, %s115
      %p124 = scmp.eq.s32.totalorder %s22, 3
      %p125 = por %p123, %p124
      %p126 = scmp.ne.s32.totalorder %s115, %s116
      %p127 = scmp.eq.s32.totalorder %s22, 0
      %p128 = por %p126, %p127
      %p129 = scmp.ne.s32.totalorder %s115, %s116
      %p130 = scmp.eq.s32.totalorder %s23, 3
      %p131 = por %p129, %p130
      %p133 = scmp.ne.s32.totalorder %s116, %s132
      %p134 = scmp.eq.s32.totalorder %s23, 0
      %p135 = por %p133, %p134
      %s136 = ssub.s32 %s24, %s36
      %p137 = scmp.eq.s32.totalorder %s136, 0
      %s139 = sadd.s32 %s138, 1
      %s140 = scalar_select %p137, %s138, %s139
      %p143 = pneg %p137
      %p144 = scmp.eq.s32.totalorder %s17, 3
      %p145 = por %p143, %p144
      %p146 = scmp.ne.s32.totalorder %s138, %s141
      %p147 = scmp.eq.s32.totalorder %s17, 0
      %p148 = por %p146, %p147
      %p149 = scmp.ne.s32.totalorder %s138, %s141
      %p150 = scmp.eq.s32.totalorder %s22, 3
      %p151 = por %p149, %p150
      %p152 = scmp.ne.s32.totalorder %s141, %s142
      %p153 = scmp.eq.s32.totalorder %s22, 0
      %p154 = por %p152, %p153
      %p155 = scmp.ne.s32.totalorder %s141, %s142
      %p156 = scmp.eq.s32.totalorder %s23, 3
      %p157 = por %p155, %p156
      %p159 = scmp.ne.s32.totalorder %s142, %s158
      %p160 = scmp.eq.s32.totalorder %s23, 0
      %p161 = por %p159, %p160
      %p162 = scmp.le.s32.totalorder 1, %s17
      %p163 = scmp.lt.s32.totalorder %s17, 5
      %p164 = pnand %p162, %p163
      %p165 = pneg %p164
      // Predicated region
      $region9: #{tpu_custom_call.1} parent=5 // pred_check
        _
      $region10: #{tpu_custom_call.1} parent=5 // pred_check_branch
        %167 = sbr.rel (%p164) target = $region12
      $region11: #{tpu_custom_call.1} parent=5 // pred_region
        %s168 = ssub.s32 %s17, 1
        // Predicated region
        $region13: #{tpu_custom_call.1} parent=11 // pred_check
          %p169 = pneg %p76
        $region14: #{tpu_custom_call.1} parent=11 // pred_check_branch
          %171 = sbr.rel (%p169) target = $region16
        $region15: #{tpu_custom_call.1} parent=11 // pred_region
          %s173 = ssub.s32 1024, 1024
          %174 = vsyncadd [#allocation10], %s173
          %s175 = sshll.u32 [#allocation9], 4
          %s176 = int_to_ptr.vmem [resolvable:$true] %s175
          %181 = dma.hbm_to_vmem [thread:$0]  %s1, 1024, %s176, [#allocation10], 64, 64, 4
        $region16: #{tpu_custom_call.1} parent=11 // pred_fallthru
          _
      $region12: #{tpu_custom_call.1} parent=5 // pred_fallthru
        _
      %p182 = scmp.lt.s32.totalorder %s17, 4
      // Predicated region
      $region17: #{tpu_custom_call.1} parent=5 // pred_check
        %p183 = pneg %p182
      $region18: #{tpu_custom_call.1} parent=5 // pred_check_branch
        %185 = sbr.rel (%p183) target = $region20
      $region19: #{tpu_custom_call.1} parent=5 // pred_region
        // Predicated region
        $region21: #{tpu_custom_call.1} parent=19 // pred_check
          %p186 = pneg %p49
        $region22: #{tpu_custom_call.1} parent=19 // pred_check_branch
          %188 = sbr.rel (%p186) target = $region24
        $region23: #{tpu_custom_call.1} parent=19 // pred_region
          %s189 = sand.u32 %s17, 1
          %s190 = scalar_lea.sflag [#allocation7], %s189
          %s191 = sand.u32 %s39, 1
          %s192 = smul.addr %s191, 64
          %s193 = scalar_lea.vmem [#allocation6], %s192
          %s195 = ssub.s32 1024, 1024
          %196 = vsyncadd %s190, %s195
          %s197 = smul.addr %s24, 64
          %s198 = scalar_lea.hbm %s0, %s197
          %s199 = sshll.u32 %s193, 4
          %s200 = int_to_ptr.vmem [resolvable:$true] %s199
          %205 = dma.hbm_to_vmem [thread:$0]  %s198, 1024, %s200, %s190, 128, 64, 4
        $region24: #{tpu_custom_call.1} parent=19 // pred_fallthru
          _
        // Predicated region
        $region25: #{tpu_custom_call.1} parent=19 // pred_check
          %p206 = pneg %p96
        $region26: #{tpu_custom_call.1} parent=19 // pred_check_branch
          %208 = sbr.rel (%p206) target = $region28
        $region27: #{tpu_custom_call.1} parent=19 // pred_region
          %s209 = sand.u32 %s17, 1
          %s210 = scalar_lea.sflag [#allocation7], %s209
          %s211 = sand.u32 %s86, 1
          %s212 = smul.addr %s211, 256
          %s213 = scalar_lea.vmem [#allocation11], %s212
          %s214 = smul.u32 64, %s25
          %s216 = ssub.s32 4096, 4096
          %217 = vsyncadd %s210, %s216
          %s218 = smul.addr %s214, 64
          %s219 = scalar_lea.hbm %s2, %s218
          %s220 = sshll.u32 %s213, 4
          %s221 = int_to_ptr.vmem [resolvable:$true] %s220
          %226 = dma.hbm_to_vmem [thread:$0]  %s219, 4096, %s221, %s210, 64, 64, 4
        $region28: #{tpu_custom_call.1} parent=19 // pred_fallthru
          _
        // Predicated region
        $region29: #{tpu_custom_call.1} parent=19 // pred_check
          %p227 = pneg %p122
        $region30: #{tpu_custom_call.1} parent=19 // pred_check_branch
          %229 = sbr.rel (%p227) target = $region32
        $region31: #{tpu_custom_call.1} parent=19 // pred_region
          %p230 = scmp.lt.s32.totalorder %s24, 1
          %s231 = scalar_select %p230, %s24, 1
          %s232 = scalar_lea.vmem %s3, %s231
        $region32: #{tpu_custom_call.1} parent=19 // pred_fallthru
          _
      $region20: #{tpu_custom_call.1} parent=5 // pred_fallthru
        _
      %p233 = scmp.le.s32.totalorder 1, %s17
      %p234 = scmp.lt.s32.totalorder %s17, 5
      %p235 = pnand %p233, %p234
      %p236 = pneg %p235
      // Predicated region
      $region33: #{tpu_custom_call.1} parent=5 // pred_check
        _
      $region34: #{tpu_custom_call.1} parent=5 // pred_check_branch
        %238 = sbr.rel (%p235) target = $region36
      $region35: #{tpu_custom_call.1} parent=5 // pred_region
        %s239 = ssub.s32 %s17, 1
        %s240 = sand.u32 %s22, 1
        %s241 = scalar_lea.sflag [#allocation7], %s240
        %s242 = sand.u32 %s42, 1
        %s243 = smul.addr %s242, 64
        %s244 = scalar_lea.vmem [#allocation6], %s243
        // Predicated region
        $region37: #{tpu_custom_call.1} parent=35 // pred_check
          %p245 = pneg %p55
        $region38: #{tpu_custom_call.1} parent=35 // pred_check_branch
          %247 = sbr.rel (%p245) target = $region40
        $region39: #{tpu_custom_call.1} parent=35 // pred_region
          %248 = dma.done %s241, 1024
        $region40: #{tpu_custom_call.1} parent=35 // pred_fallthru
          _
        // Predicated region
        $region41: #{tpu_custom_call.1} parent=35 // pred_check
          %p249 = pneg %p76
        $region42: #{tpu_custom_call.1} parent=35 // pred_check_branch
          %251 = sbr.rel (%p249) target = $region44
        $region43: #{tpu_custom_call.1} parent=35 // pred_region
          %252 = dma.done [#allocation10], 1024
        $region44: #{tpu_custom_call.1} parent=35 // pred_fallthru
          _
        %s253 = sand.u32 %s22, 1
        %s254 = scalar_lea.sflag [#allocation7], %s253
        %s255 = sand.u32 %s89, 1
        %s256 = smul.addr %s255, 256
        %s257 = scalar_lea.vmem [#allocation11], %s256
        // Predicated region
        $region45: #{tpu_custom_call.1} parent=35 // pred_check
          %p258 = pneg %p102
        $region46: #{tpu_custom_call.1} parent=35 // pred_check_branch
          %260 = sbr.rel (%p258) target = $region48
        $region47: #{tpu_custom_call.1} parent=35 // pred_region
          %261 = dma.done %s254, 4096
        $region48: #{tpu_custom_call.1} parent=35 // pred_fallthru
          _
        %s262 = sand.u32 %s22, 1
        %s263 = scalar_lea.sflag [#allocation7], %s262
        %s264 = sand.u32 %s42, 1
        %s265 = smul.addr %s264, 64
        %s266 = scalar_lea.vmem [#allocation6], %s265
        %p267 = pneg %p55
        %p268 = pneg %p52
        %p269 = pneg %p76
        %p270 = pneg %p73
        %s271 = sand.u32 %s22, 1
        %s272 = scalar_lea.sflag [#allocation7], %s271
        %s273 = sand.u32 %s89, 1
        %s274 = smul.addr %s273, 256
        %s275 = scalar_lea.vmem [#allocation11], %s274
        %p276 = pneg %p102
        %p277 = pneg %p99
        %p278 = scmp.lt.s32.totalorder %s26, 1
        %s279 = scalar_select %p278, %s26, 1
        %s280 = scalar_lea.vmem %s3, %s279
        %p281 = pneg %p128
        %p282 = pneg %p125
        %p283 = pneg %p154
        %p284 = pneg %p151
        %s285 = sand.u32 %s141, 1
        %s286 = scalar_lea.sflag [#allocation8], %s285
        %s287 = sand.u32 %s141, 1
        %s288 = scalar_lea.vmem [#allocation12], %s287
        %s289 = smul.u32 64, %s27
        %p290 = scmp.lt.s32.totalorder %s26, 1
        %s291 = scalar_select %p290, %s26, 1
        %s292 = scalar_lea.vmem %s3, %s291
        %p294 = scmp.eq.s32.totalorder %s27, 0
        // Predicated region
        $region49: #{tpu_custom_call.1} parent=35 // pred_check
          %p295 = pneg %p294
        $region50: #{tpu_custom_call.1} parent=35 // pred_check_branch
          %297 = sbr.rel (%p295) target = $region52
        $region51: #{tpu_custom_call.1} parent=35 // pred_region
          %v298 = vld [vmem:[#allocation9] sm:$0xf]
          %v299 = vld [vmem:[#allocation9 + $0x4] sm:$0xf]
          %v300 = vld [vmem:[#allocation9 + $0x8] sm:$0xf]
          %v301 = vld [vmem:[#allocation9 + $0xc] sm:$0xf]
          %v302 = vld [vmem:[#allocation9 + $0x10] sm:$0xf]
          %v303 = vld [vmem:[#allocation9 + $0x14] sm:$0xf]
          %v304 = vld [vmem:[#allocation9 + $0x18] sm:$0xf]
          %v305 = vld [vmem:[#allocation9 + $0x1c] sm:$0xf]
          %v306 = vld [vmem:[#allocation9 + $0x20] sm:$0xf]
          %v307 = vld [vmem:[#allocation9 + $0x24] sm:$0xf]
          %v308 = vld [vmem:[#allocation9 + $0x28] sm:$0xf]
          %v309 = vld [vmem:[#allocation9 + $0x2c] sm:$0xf]
          %v310 = vld [vmem:[#allocation9 + $0x30] sm:$0xf]
          %v311 = vld [vmem:[#allocation9 + $0x34] sm:$0xf]
          %v312 = vld [vmem:[#allocation9 + $0x38] sm:$0xf]
          %v313 = vld [vmem:[#allocation9 + $0x3c] sm:$0xf]
          %v314 = vld [vmem:[%s244] sm:$0xf]
          %v315 = vld [vmem:[%s244 + $0x4] sm:$0xf]
          %v316 = vld [vmem:[%s244 + $0x8] sm:$0xf]
          %v317 = vld [vmem:[%s244 + $0xc] sm:$0xf]
          %v318 = vld [vmem:[%s244 + $0x10] sm:$0xf]
          %v319 = vld [vmem:[%s244 + $0x14] sm:$0xf]
          %v320 = vld [vmem:[%s244 + $0x18] sm:$0xf]
          %v321 = vld [vmem:[%s244 + $0x1c] sm:$0xf]
          %v322 = vld [vmem:[%s244 + $0x20] sm:$0xf]
          %v323 = vld [vmem:[%s244 + $0x24] sm:$0xf]
          %v324 = vld [vmem:[%s244 + $0x28] sm:$0xf]
          %v325 = vld [vmem:[%s244 + $0x2c] sm:$0xf]
          %v326 = vld [vmem:[%s244 + $0x30] sm:$0xf]
          %v327 = vld [vmem:[%s244 + $0x34] sm:$0xf]
          %v328 = vld [vmem:[%s244 + $0x38] sm:$0xf]
          %v329 = vld [vmem:[%s244 + $0x3c] sm:$0xf]
          %v346 = vunpack.c.l.b16 %v298
          %v347 = vunpack.c.l.b16 %v299
          %v348 = vunpack.c.l.b16 %v300
          %v349 = vunpack.c.l.b16 %v301
          %v350 = vunpack.c.l.b16 %v302
          %v351 = vunpack.c.l.b16 %v303
          %v352 = vunpack.c.l.b16 %v304
          %v353 = vunpack.c.l.b16 %v305
          %v354 = vunpack.c.l.b16 %v306
          %v355 = vunpack.c.l.b16 %v307
          %v356 = vunpack.c.l.b16 %v308
          %v357 = vunpack.c.l.b16 %v309
          %v358 = vunpack.c.l.b16 %v310
          %v359 = vunpack.c.l.b16 %v311
          %v360 = vunpack.c.l.b16 %v312
          %v361 = vunpack.c.l.b16 %v313
          %v362 = vpack.c.b16 %v347, %v346
          %v363 = vpack.c.b16 %v349, %v348
          %v364 = vpack.c.b16 %v351, %v350
          %v365 = vpack.c.b16 %v353, %v352
          %v366 = vpack.c.b16 %v355, %v354
          %v367 = vpack.c.b16 %v357, %v356
          %v368 = vpack.c.b16 %v359, %v358
          %v369 = vpack.c.b16 %v361, %v360
          %v394 = vunpack.c.l.b16 %v314
          %v395 = vunpack.c.l.b16 %v315
          %v396 = vunpack.c.l.b16 %v316
          %v397 = vunpack.c.l.b16 %v317
          %v398 = vunpack.c.l.b16 %v318
          %v399 = vunpack.c.l.b16 %v319
          %v400 = vunpack.c.l.b16 %v320
          %v401 = vunpack.c.l.b16 %v321
          %v402 = vunpack.c.l.b16 %v322
          %v403 = vunpack.c.l.b16 %v323
          %v404 = vunpack.c.l.b16 %v324
          %v405 = vunpack.c.l.b16 %v325
          %v406 = vunpack.c.l.b16 %v326
          %v407 = vunpack.c.l.b16 %v327
          %v408 = vunpack.c.l.b16 %v328
          %v409 = vunpack.c.l.b16 %v329
          %v410 = vpack.c.b16 %v395, %v394
          %v411 = vpack.c.b16 %v397, %v396
          %v412 = vpack.c.b16 %v399, %v398
          %v413 = vpack.c.b16 %v401, %v400
          %v414 = vpack.c.b16 %v403, %v402
          %v415 = vpack.c.b16 %v405, %v404
          %v416 = vpack.c.b16 %v407, %v406
          %v417 = vpack.c.b16 %v409, %v408
          %426 = vmatprep.subr.bf16.mxu0 0
          %427 = vmatpush1.bf16.msra.mxu0 %v410
          %428 = vmatprep.subr.bf16.mxu0 0
          %429 = vmatpush1.bf16.msra.mxu0 %v411
          %430 = vmatprep.subr.bf16.mxu0 0
          %431 = vmatpush1.bf16.msra.mxu0 %v412
          %432 = vmatprep.subr.bf16.mxu0 0
          %433 = vmatpush1.bf16.msra.mxu0 %v413
          %434 = vmatprep.subr.bf16.mxu0 0
          %435 = vmatpush1.bf16.msra.mxu0 %v414
          %436 = vmatprep.subr.bf16.mxu0 0
          %437 = vmatpush1.bf16.msra.mxu0 %v415
          %438 = vmatprep.subr.bf16.mxu0 0
          %439 = vmatpush1.bf16.msra.mxu0 %v416
          %440 = vmatprep.subr.bf16.mxu0 0
          %441 = vmatpush1.bf16.msra.mxu0 %v417
          %442 = vmatprep.subr.bf16.mxu0 0
          %443 = vmatpush1.bf16.msra.mxu0 0
          %444 = vmatprep.subr.bf16.mxu0 0
          %445 = vmatpush1.bf16.msra.mxu0 0
          %446 = vmatprep.subr.bf16.mxu0 0
          %447 = vmatpush1.bf16.msra.mxu0 0
          %448 = vmatprep.subr.bf16.mxu0 0
          %449 = vmatpush1.bf16.msra.mxu0 0
          %450 = vmatprep.subr.bf16.mxu0 0
          %451 = vmatpush1.bf16.msra.mxu0 0
          %452 = vmatprep.subr.bf16.mxu0 0
          %453 = vmatpush1.bf16.msra.mxu0 0
          %454 = vmatprep.subr.bf16.mxu0 0
          %455 = vmatpush1.bf16.msra.mxu0 0
          %456 = vmatprep.subr.bf16.mxu0 0
          %457 = vmatpush1.bf16.msra.mxu0 0
          %458 = vmatprep.mubr.bf16.mxu0 0
          %459 = vmatmul.mubr.bf16.gmra.mrb[0].mxu0 %v362
          %v460 = vpop.f32.mrb[0].mxu0
          %v461 = vadd.f32 0.0, %v460
          %v462 = vpop.f32.mrb[0].mxu0
          %v463 = vpop.f32.mrb[0].mxu0
          %v464 = vadd.f32 0.0, %v463
          %v465 = vpop.f32.mrb[0].mxu0
          %466 = vmatprep.mubr.bf16.mxu0 0
          %467 = vmatmul.mubr.bf16.gmra.mrb[0].mxu0 %v363
          %v468 = vpop.f32.mrb[0].mxu0
          %v469 = vadd.f32 0.0, %v468
          %v470 = vpop.f32.mrb[0].mxu0
          %v471 = vpop.f32.mrb[0].mxu0
          %v472 = vadd.f32 0.0, %v471
          %v473 = vpop.f32.mrb[0].mxu0
          %474 = vmatprep.mubr.bf16.mxu0 0
          %475 = vmatmul.mubr.bf16.gmra.mrb[0].mxu0 %v364
          %v476 = vpop.f32.mrb[0].mxu0
          %v477 = vadd.f32 0.0, %v476
          %v478 = vpop.f32.mrb[0].mxu0
          %v479 = vpop.f32.mrb[0].mxu0
          %v480 = vadd.f32 0.0, %v479
          %v481 = vpop.f32.mrb[0].mxu0
          %482 = vmatprep.mubr.bf16.mxu0 0
          %483 = vmatmul.mubr.bf16.gmra.mrb[0].mxu0 %v365
          %v484 = vpop.f32.mrb[0].mxu0
          %v485 = vadd.f32 0.0, %v484
          %v486 = vpop.f32.mrb[0].mxu0
          %v487 = vpop.f32.mrb[0].mxu0
          %v488 = vadd.f32 0.0, %v487
          %v489 = vpop.f32.mrb[0].mxu0
          %490 = vmatprep.mubr.bf16.mxu0 0
          %491 = vmatmul.mubr.bf16.gmra.mrb[0].mxu0 %v366
          %v492 = vpop.f32.mrb[0].mxu0
          %v493 = vadd.f32 0.0, %v492
          %v494 = vpop.f32.mrb[0].mxu0
          %v495 = vpop.f32.mrb[0].mxu0
          %v496 = vadd.f32 0.0, %v495
          %v497 = vpop.f32.mrb[0].mxu0
          %498 = vmatprep.mubr.bf16.mxu0 0
          %499 = vmatmul.mubr.bf16.gmra.mrb[0].mxu0 %v367
          %v500 = vpop.f32.mrb[0].mxu0
          %v501 = vadd.f32 0.0, %v500
          %v502 = vpop.f32.mrb[0].mxu0
          %v503 = vpop.f32.mrb[0].mxu0
          %v504 = vadd.f32 0.0, %v503
          %v505 = vpop.f32.mrb[0].mxu0
          %506 = vmatprep.mubr.bf16.mxu0 0
          %507 = vmatmul.mubr.bf16.gmra.mrb[0].mxu0 %v368
          %v508 = vpop.f32.mrb[0].mxu0
          %v509 = vadd.f32 0.0, %v508
          %v510 = vpop.f32.mrb[0].mxu0
          %v511 = vpop.f32.mrb[0].mxu0
          %v512 = vadd.f32 0.0, %v511
          %v513 = vpop.f32.mrb[0].mxu0
          %514 = vmatprep.mubr.bf16.mxu0 0
          %515 = vmatmul.mubr.bf16.gmra.mrb[0].mxu0 %v369
          %v516 = vpop.f32.mrb[0].mxu0
          %v517 = vadd.f32 0.0, %v516
          %v518 = vpop.f32.mrb[0].mxu0
          %v519 = vpop.f32.mrb[0].mxu0
          %v520 = vadd.f32 0.0, %v519
          %v521 = vpop.f32.mrb[0].mxu0
          %522 = vdwg.mxu0
          %v523 = vtanh.pop %v461
          %v524 = vtanh.pop %v464
          %v525 = vtanh.pop %v469
          %v526 = vtanh.pop %v472
          %v527 = vtanh.pop %v477
          %v528 = vtanh.pop %v480
          %v529 = vtanh.pop %v485
          %v530 = vtanh.pop %v488
          %v531 = vtanh.pop %v493
          %v532 = vtanh.pop %v496
          %v533 = vtanh.pop %v501
          %v534 = vtanh.pop %v504
          %v535 = vtanh.pop %v509
          %v536 = vtanh.pop %v512
          %v537 = vtanh.pop %v517
          %v538 = vtanh.pop %v520
          %v539 = vpack.c.bf16 %v524, %v523
          %v540 = vpack.c.bf16 %v526, %v525
          %v541 = vpack.c.bf16 %v528, %v527
          %v542 = vpack.c.bf16 %v530, %v529
          %v543 = vpack.c.bf16 %v532, %v531
          %v544 = vpack.c.bf16 %v534, %v533
          %v545 = vpack.c.bf16 %v536, %v535
          %v546 = vpack.c.bf16 %v538, %v537
          %547 = vst [vmem:[#allocation2] sm:$0xff] %v539
          %548 = vst [vmem:[#allocation2 + $0x8] sm:$0xff] %v540
          %549 = vst [vmem:[#allocation2 + $0x10] sm:$0xff] %v541
          %550 = vst [vmem:[#allocation2 + $0x18] sm:$0xff] %v542
          %551 = vst [vmem:[#allocation2 + $0x20] sm:$0xff] %v543
          %552 = vst [vmem:[#allocation2 + $0x28] sm:$0xff] %v544
          %553 = vst [vmem:[#allocation2 + $0x30] sm:$0xff] %v545
          %554 = vst [vmem:[#allocation2 + $0x38] sm:$0xff] %v546
          %555 = vst [vmem:[#allocation3] sm:$0x1] -1e+30
          %556 = vst [vmem:[#allocation4] sm:$0x1] 0.0
          %557 = vst [vmem:[#allocation5] sm:$0x1] 0.0
        $region52: #{tpu_custom_call.1} parent=35 // pred_fallthru
          _
        %v558 = vld [vmem:[%s257] sm:$0xf]
        %v559 = vld [vmem:[%s257 + $0x4] sm:$0xf]
        %v560 = vld [vmem:[%s257 + $0x8] sm:$0xf]
        %v561 = vld [vmem:[%s257 + $0xc] sm:$0xf]
        %v562 = vld [vmem:[%s257 + $0x10] sm:$0xf]
        %v563 = vld [vmem:[%s257 + $0x14] sm:$0xf]
        %v564 = vld [vmem:[%s257 + $0x18] sm:$0xf]
        %v565 = vld [vmem:[%s257 + $0x1c] sm:$0xf]
        %v566 = vld [vmem:[%s257 + $0x20] sm:$0xf]
        %v567 = vld [vmem:[%s257 + $0x24] sm:$0xf]
        %v568 = vld [vmem:[%s257 + $0x28] sm:$0xf]
        %v569 = vld [vmem:[%s257 + $0x2c] sm:$0xf]
        %v570 = vld [vmem:[%s257 + $0x30] sm:$0xf]
        %v571 = vld [vmem:[%s257 + $0x34] sm:$0xf]
        %v572 = vld [vmem:[%s257 + $0x38] sm:$0xf]
        %v573 = vld [vmem:[%s257 + $0x3c] sm:$0xf]
        %v574 = vld [vmem:[%s257 + $0x40] sm:$0xf]
        %v575 = vld [vmem:[%s257 + $0x44] sm:$0xf]
        %v576 = vld [vmem:[%s257 + $0x48] sm:$0xf]
        %v577 = vld [vmem:[%s257 + $0x4c] sm:$0xf]
        %v578 = vld [vmem:[%s257 + $0x50] sm:$0xf]
        %v579 = vld [vmem:[%s257 + $0x54] sm:$0xf]
        %v580 = vld [vmem:[%s257 + $0x58] sm:$0xf]
        %v581 = vld [vmem:[%s257 + $0x5c] sm:$0xf]
        %v582 = vld [vmem:[%s257 + $0x60] sm:$0xf]
        %v583 = vld [vmem:[%s257 + $0x64] sm:$0xf]
        %v584 = vld [vmem:[%s257 + $0x68] sm:$0xf]
        %v585 = vld [vmem:[%s257 + $0x6c] sm:$0xf]
        %v586 = vld [vmem:[%s257 + $0x70] sm:$0xf]
        %v587 = vld [vmem:[%s257 + $0x74] sm:$0xf]
        %v588 = vld [vmem:[%s257 + $0x78] sm:$0xf]
        %v589 = vld [vmem:[%s257 + $0x7c] sm:$0xf]
        %v590 = vld [vmem:[%s257 + $0x80] sm:$0xf]
        %v591 = vld [vmem:[%s257 + $0x84] sm:$0xf]
        %v592 = vld [vmem:[%s257 + $0x88] sm:$0xf]
        %v593 = vld [vmem:[%s257 + $0x8c] sm:$0xf]
        %v594 = vld [vmem:[%s257 + $0x90] sm:$0xf]
        %v595 = vld [vmem:[%s257 + $0x94] sm:$0xf]
        %v596 = vld [vmem:[%s257 + $0x98] sm:$0xf]
        %v597 = vld [vmem:[%s257 + $0x9c] sm:$0xf]
        %v598 = vld [vmem:[%s257 + $0xa0] sm:$0xf]
        %v599 = vld [vmem:[%s257 + $0xa4] sm:$0xf]
        %v600 = vld [vmem:[%s257 + $0xa8] sm:$0xf]
        %v601 = vld [vmem:[%s257 + $0xac] sm:$0xf]
        %v602 = vld [vmem:[%s257 + $0xb0] sm:$0xf]
        %v603 = vld [vmem:[%s257 + $0xb4] sm:$0xf]
        %v604 = vld [vmem:[%s257 + $0xb8] sm:$0xf]
        %v605 = vld [vmem:[%s257 + $0xbc] sm:$0xf]
        %v606 = vld [vmem:[%s257 + $0xc0] sm:$0xf]
        %v607 = vld [vmem:[%s257 + $0xc4] sm:$0xf]
        %v608 = vld [vmem:[%s257 + $0xc8] sm:$0xf]
        %v609 = vld [vmem:[%s257 + $0xcc] sm:$0xf]
        %v610 = vld [vmem:[%s257 + $0xd0] sm:$0xf]
        %v611 = vld [vmem:[%s257 + $0xd4] sm:$0xf]
        %v612 = vld [vmem:[%s257 + $0xd8] sm:$0xf]
        %v613 = vld [vmem:[%s257 + $0xdc] sm:$0xf]
        %v614 = vld [vmem:[%s257 + $0xe0] sm:$0xf]
        %v615 = vld [vmem:[%s257 + $0xe4] sm:$0xf]
        %v616 = vld [vmem:[%s257 + $0xe8] sm:$0xf]
        %v617 = vld [vmem:[%s257 + $0xec] sm:$0xf]
        %v618 = vld [vmem:[%s257 + $0xf0] sm:$0xf]
        %v619 = vld [vmem:[%s257 + $0xf4] sm:$0xf]
        %v620 = vld [vmem:[%s257 + $0xf8] sm:$0xf]
        %v621 = vld [vmem:[%s257 + $0xfc] sm:$0xf]
        %v622 = vld [vmem:[#allocation2] sm:$0xff]
        %v623 = vld [vmem:[#allocation2 + $0x8] sm:$0xff]
        %v624 = vld [vmem:[#allocation2 + $0x10] sm:$0xff]
        %v625 = vld [vmem:[#allocation2 + $0x18] sm:$0xff]
        %v626 = vld [vmem:[#allocation2 + $0x20] sm:$0xff]
        %v627 = vld [vmem:[#allocation2 + $0x28] sm:$0xff]
        %v628 = vld [vmem:[#allocation2 + $0x30] sm:$0xff]
        %v629 = vld [vmem:[#allocation2 + $0x38] sm:$0xff]
        %v694 = vunpack.c.l.b16 %v558
        %v695 = vunpack.c.l.b16 %v559
        %v696 = vunpack.c.l.b16 %v560
        %v697 = vunpack.c.l.b16 %v561
        %v698 = vunpack.c.l.b16 %v562
        %v699 = vunpack.c.l.b16 %v563
        %v700 = vunpack.c.l.b16 %v564
        %v701 = vunpack.c.l.b16 %v565
        %v702 = vunpack.c.l.b16 %v566
        %v703 = vunpack.c.l.b16 %v567
        %v704 = vunpack.c.l.b16 %v568
        %v705 = vunpack.c.l.b16 %v569
        %v706 = vunpack.c.l.b16 %v570
        %v707 = vunpack.c.l.b16 %v571
        %v708 = vunpack.c.l.b16 %v572
        %v709 = vunpack.c.l.b16 %v573
        %v710 = vunpack.c.l.b16 %v574
        %v711 = vunpack.c.l.b16 %v575
        %v712 = vunpack.c.l.b16 %v576
        %v713 = vunpack.c.l.b16 %v577
        %v714 = vunpack.c.l.b16 %v578
        %v715 = vunpack.c.l.b16 %v579
        %v716 = vunpack.c.l.b16 %v580
        %v717 = vunpack.c.l.b16 %v581
        %v718 = vunpack.c.l.b16 %v582
        %v719 = vunpack.c.l.b16 %v583
        %v720 = vunpack.c.l.b16 %v584
        %v721 = vunpack.c.l.b16 %v585
        %v722 = vunpack.c.l.b16 %v586
        %v723 = vunpack.c.l.b16 %v587
        %v724 = vunpack.c.l.b16 %v588
        %v725 = vunpack.c.l.b16 %v589
        %v726 = vunpack.c.l.b16 %v590
        %v727 = vunpack.c.l.b16 %v591
        %v728 = vunpack.c.l.b16 %v592
        %v729 = vunpack.c.l.b16 %v593
        %v730 = vunpack.c.l.b16 %v594
        %v731 = vunpack.c.l.b16 %v595
        %v732 = vunpack.c.l.b16 %v596
        %v733 = vunpack.c.l.b16 %v597
        %v734 = vunpack.c.l.b16 %v598
        %v735 = vunpack.c.l.b16 %v599
        %v736 = vunpack.c.l.b16 %v600
        %v737 = vunpack.c.l.b16 %v601
        %v738 = vunpack.c.l.b16 %v602
        %v739 = vunpack.c.l.b16 %v603
        %v740 = vunpack.c.l.b16 %v604
        %v741 = vunpack.c.l.b16 %v605
        %v742 = vunpack.c.l.b16 %v606
        %v743 = vunpack.c.l.b16 %v607
        %v744 = vunpack.c.l.b16 %v608
        %v745 = vunpack.c.l.b16 %v609
        %v746 = vunpack.c.l.b16 %v610
        %v747 = vunpack.c.l.b16 %v611
        %v748 = vunpack.c.l.b16 %v612
        %v749 = vunpack.c.l.b16 %v613
        %v750 = vunpack.c.l.b16 %v614
        %v751 = vunpack.c.l.b16 %v615
        %v752 = vunpack.c.l.b16 %v616
        %v753 = vunpack.c.l.b16 %v617
        %v754 = vunpack.c.l.b16 %v618
        %v755 = vunpack.c.l.b16 %v619
        %v756 = vunpack.c.l.b16 %v620
        %v757 = vunpack.c.l.b16 %v621
        %v758 = vpack.c.b16 %v695, %v694
        %v759 = vpack.c.b16 %v697, %v696
        %v760 = vpack.c.b16 %v699, %v698
        %v761 = vpack.c.b16 %v701, %v700
        %v762 = vpack.c.b16 %v703, %v702
        %v763 = vpack.c.b16 %v705, %v704
        %v764 = vpack.c.b16 %v707, %v706
        %v765 = vpack.c.b16 %v709, %v708
        %v766 = vpack.c.b16 %v711, %v710
        %v767 = vpack.c.b16 %v713, %v712
        %v768 = vpack.c.b16 %v715, %v714
        %v769 = vpack.c.b16 %v717, %v716
        %v770 = vpack.c.b16 %v719, %v718
        %v771 = vpack.c.b16 %v721, %v720
        %v772 = vpack.c.b16 %v723, %v722
        %v773 = vpack.c.b16 %v725, %v724
        %v774 = vpack.c.b16 %v727, %v726
        %v775 = vpack.c.b16 %v729, %v728
        %v776 = vpack.c.b16 %v731, %v730
        %v777 = vpack.c.b16 %v733, %v732
        %v778 = vpack.c.b16 %v735, %v734
        %v779 = vpack.c.b16 %v737, %v736
        %v780 = vpack.c.b16 %v739, %v738
        %v781 = vpack.c.b16 %v741, %v740
        %v782 = vpack.c.b16 %v743, %v742
        %v783 = vpack.c.b16 %v745, %v744
        %v784 = vpack.c.b16 %v747, %v746
        %v785 = vpack.c.b16 %v749, %v748
        %v786 = vpack.c.b16 %v751, %v750
        %v787 = vpack.c.b16 %v753, %v752
        %v788 = vpack.c.b16 %v755, %v754
        %v789 = vpack.c.b16 %v757, %v756
        %822 = vmatprep.subr.bf16.mxu0 0
        %823 = vmatpush1.bf16.msra.mxu0 %v622
        %824 = vmatprep.subr.bf16.mxu0 0
        %825 = vmatpush1.bf16.msra.mxu0 %v623
        %826 = vmatprep.subr.bf16.mxu0 0
        %827 = vmatpush1.bf16.msra.mxu0 %v624
        %828 = vmatprep.subr.bf16.mxu0 0
        %829 = vmatpush1.bf16.msra.mxu0 %v625
        %830 = vmatprep.subr.bf16.mxu0 0
        %831 = vmatpush1.bf16.msra.mxu0 %v626
        %832 = vmatprep.subr.bf16.mxu0 0
        %833 = vmatpush1.bf16.msra.mxu0 %v627
        %834 = vmatprep.subr.bf16.mxu0 0
        %835 = vmatpush1.bf16.msra.mxu0 %v628
        %836 = vmatprep.subr.bf16.mxu0 0
        %837 = vmatpush1.bf16.msra.mxu0 %v629
        %838 = vmatprep.subr.bf16.mxu0 0
        %839 = vmatpush1.bf16.msra.mxu0 0
        %840 = vmatprep.subr.bf16.mxu0 0
        %841 = vmatpush1.bf16.msra.mxu0 0
        %842 = vmatprep.subr.bf16.mxu0 0
        %843 = vmatpush1.bf16.msra.mxu0 0
        %844 = vmatprep.subr.bf16.mxu0 0
        %845 = vmatpush1.bf16.msra.mxu0 0
        %846 = vmatprep.subr.bf16.mxu0 0
        %847 = vmatpush1.bf16.msra.mxu0 0
        %848 = vmatprep.subr.bf16.mxu0 0
        %849 = vmatpush1.bf16.msra.mxu0 0
        %850 = vmatprep.subr.bf16.mxu0 0
        %851 = vmatpush1.bf16.msra.mxu0 0
        %852 = vmatprep.subr.bf16.mxu0 0
        %853 = vmatpush1.bf16.msra.mxu0 0
        %854 = vmatprep.mubr.bf16.mxu0 0
        %855 = vmatmul.mubr.bf16.gmra.mrb[0].mxu0 %v758
        %v856 = vpop.f32.mrb[0].mxu0
        %v857 = vadd.f32 0.0, %v856
        %v858 = vpop.f32.mrb[0].mxu0
        %v859 = vpop.f32.mrb[0].mxu0
        %v860 = vadd.f32 0.0, %v859
        %v861 = vpop.f32.mrb[0].mxu0
        %862 = vmatprep.mubr.bf16.mxu0 0
        %863 = vmatmul.mubr.bf16.gmra.mrb[0].mxu0 %v759
        %v864 = vpop.f32.mrb[0].mxu0
        %v865 = vadd.f32 0.0, %v864
        %v866 = vpop.f32.mrb[0].mxu0
        %v867 = vpop.f32.mrb[0].mxu0
        %v868 = vadd.f32 0.0, %v867
        %v869 = vpop.f32.mrb[0].mxu0
        %870 = vmatprep.mubr.bf16.mxu0 0
        %871 = vmatmul.mubr.bf16.gmra.mrb[0].mxu0 %v760
        %v872 = vpop.f32.mrb[0].mxu0
        %v873 = vadd.f32 0.0, %v872
        %v874 = vpop.f32.mrb[0].mxu0
        %v875 = vpop.f32.mrb[0].mxu0
        %v876 = vadd.f32 0.0, %v875
        %v877 = vpop.f32.mrb[0].mxu0
        %878 = vmatprep.mubr.bf16.mxu0 0
        %879 = vmatmul.mubr.bf16.gmra.mrb[0].mxu0 %v761
        %v880 = vpop.f32.mrb[0].mxu0
        %v881 = vadd.f32 0.0, %v880
        %v882 = vpop.f32.mrb[0].mxu0
        %v883 = vpop.f32.mrb[0].mxu0
        %v884 = vadd.f32 0.0, %v883
        %v885 = vpop.f32.mrb[0].mxu0
        %886 = vmatprep.mubr.bf16.mxu0 0
        %887 = vmatmul.mubr.bf16.gmra.mrb[0].mxu0 %v762
        %v888 = vpop.f32.mrb[0].mxu0
        %v889 = vadd.f32 0.0, %v888
        %v890 = vpop.f32.mrb[0].mxu0
        %v891 = vpop.f32.mrb[0].mxu0
        %v892 = vadd.f32 0.0, %v891
        %v893 = vpop.f32.mrb[0].mxu0
        %894 = vmatprep.mubr.bf16.mxu0 0
        %895 = vmatmul.mubr.bf16.gmra.mrb[0].mxu0 %v763
        %v896 = vpop.f32.mrb[0].mxu0
        %v897 = vadd.f32 0.0, %v896
        %v898 = vpop.f32.mrb[0].mxu0
        %v899 = vpop.f32.mrb[0].mxu0
        %v900 = vadd.f32 0.0, %v899
        %v901 = vpop.f32.mrb[0].mxu0
        %902 = vmatprep.mubr.bf16.mxu0 0
        %903 = vmatmul.mubr.bf16.gmra.mrb[0].mxu0 %v764
        %v904 = vpop.f32.mrb[0].mxu0
        %v905 = vadd.f32 0.0, %v904
        %v906 = vpop.f32.mrb[0].mxu0
        %v907 = vpop.f32.mrb[0].mxu0
        %v908 = vadd.f32 0.0, %v907
        %v909 = vpop.f32.mrb[0].mxu0
        %910 = vmatprep.mubr.bf16.mxu0 0
        %911 = vmatmul.mubr.bf16.gmra.mrb[0].mxu0 %v765
        %v912 = vpop.f32.mrb[0].mxu0
        %v913 = vadd.f32 0.0, %v912
        %v914 = vpop.f32.mrb[0].mxu0
        %v915 = vpop.f32.mrb[0].mxu0
        %v916 = vadd.f32 0.0, %v915
        %v917 = vpop.f32.mrb[0].mxu0
        %918 = vmatprep.mubr.bf16.mxu0 0
        %919 = vmatmul.mubr.bf16.gmra.mrb[0].mxu0 %v766
        %v920 = vpop.f32.mrb[0].mxu0
        %v921 = vadd.f32 0.0, %v920
        %v922 = vpop.f32.mrb[0].mxu0
        %v923 = vpop.f32.mrb[0].mxu0
        %v924 = vadd.f32 0.0, %v923
        %v925 = vpop.f32.mrb[0].mxu0
        %926 = vmatprep.mubr.bf16.mxu0 0
        %927 = vmatmul.mubr.bf16.gmra.mrb[0].mxu0 %v767
        %v928 = vpop.f32.mrb[0].mxu0
        %v929 = vadd.f32 0.0, %v928
        %v930 = vpop.f32.mrb[0].mxu0
        %v931 = vpop.f32.mrb[0].mxu0
        %v932 = vadd.f32 0.0, %v931
        %v933 = vpop.f32.mrb[0].mxu0
        %934 = vmatprep.mubr.bf16.mxu0 0
        %935 = vmatmul.mubr.bf16.gmra.mrb[0].mxu0 %v768
        %v936 = vpop.f32.mrb[0].mxu0
        %v937 = vadd.f32 0.0, %v936
        %v938 = vpop.f32.mrb[0].mxu0
        %v939 = vpop.f32.mrb[0].mxu0
        %v940 = vadd.f32 0.0, %v939
        %v941 = vpop.f32.mrb[0].mxu0
        %942 = vmatprep.mubr.bf16.mxu0 0
        %943 = vmatmul.mubr.bf16.gmra.mrb[0].mxu0 %v769
        %v944 = vpop.f32.mrb[0].mxu0
        %v945 = vadd.f32 0.0, %v944
        %v946 = vpop.f32.mrb[0].mxu0
        %v947 = vpop.f32.mrb[0].mxu0
        %v948 = vadd.f32 0.0, %v947
        %v949 = vpop.f32.mrb[0].mxu0
        %950 = vmatprep.mubr.bf16.mxu0 0
        %951 = vmatmul.mubr.bf16.gmra.mrb[0].mxu0 %v770
        %v952 = vpop.f32.mrb[0].mxu0
        %v953 = vadd.f32 0.0, %v952
        %v954 = vpop.f32.mrb[0].mxu0
        %v955 = vpop.f32.mrb[0].mxu0
        %v956 = vadd.f32 0.0, %v955
        %v957 = vpop.f32.mrb[0].mxu0
        %958 = vmatprep.mubr.bf16.mxu0 0
        %959 = vmatmul.mubr.bf16.gmra.mrb[0].mxu0 %v771
        %v960 = vpop.f32.mrb[0].mxu0
        %v961 = vadd.f32 0.0, %v960
        %v962 = vpop.f32.mrb[0].mxu0
        %v963 = vpop.f32.mrb[0].mxu0
        %v964 = vadd.f32 0.0, %v963
        %v965 = vpop.f32.mrb[0].mxu0
        %966 = vmatprep.mubr.bf16.mxu0 0
        %967 = vmatmul.mubr.bf16.gmra.mrb[0].mxu0 %v772
        %v968 = vpop.f32.mrb[0].mxu0
        %v969 = vadd.f32 0.0, %v968
        %v970 = vpop.f32.mrb[0].mxu0
        %v971 = vpop.f32.mrb[0].mxu0
        %v972 = vadd.f32 0.0, %v971
        %v973 = vpop.f32.mrb[0].mxu0
        %974 = vmatprep.mubr.bf16.mxu0 0
        %975 = vmatmul.mubr.bf16.gmra.mrb[0].mxu0 %v773
        %v976 = vpop.f32.mrb[0].mxu0
        %v977 = vadd.f32 0.0, %v976
        %v978 = vpop.f32.mrb[0].mxu0
        %v979 = vpop.f32.mrb[0].mxu0
        %v980 = vadd.f32 0.0, %v979
        %v981 = vpop.f32.mrb[0].mxu0
        %982 = vmatprep.mubr.bf16.mxu0 0
        %983 = vmatmul.mubr.bf16.gmra.mrb[0].mxu0 %v774
        %v984 = vpop.f32.mrb[0].mxu0
        %v985 = vadd.f32 0.0, %v984
        %v986 = vpop.f32.mrb[0].mxu0
        %v987 = vpop.f32.mrb[0].mxu0
        %v988 = vadd.f32 0.0, %v987
        %v989 = vpop.f32.mrb[0].mxu0
        %990 = vmatprep.mubr.bf16.mxu0 0
        %991 = vmatmul.mubr.bf16.gmra.mrb[0].mxu0 %v775
        %v992 = vpop.f32.mrb[0].mxu0
        %v993 = vadd.f32 0.0, %v992
        %v994 = vpop.f32.mrb[0].mxu0
        %v995 = vpop.f32.mrb[0].mxu0
        %v996 = vadd.f32 0.0, %v995
        %v997 = vpop.f32.mrb[0].mxu0
        %998 = vmatprep.mubr.bf16.mxu0 0
        %999 = vmatmul.mubr.bf16.gmra.mrb[0].mxu0 %v776
        %v1000 = vpop.f32.mrb[0].mxu0
        %v1001 = vadd.f32 0.0, %v1000
        %v1002 = vpop.f32.mrb[0].mxu0
        %v1003 = vpop.f32.mrb[0].mxu0
        %v1004 = vadd.f32 0.0, %v1003
        %v1005 = vpop.f32.mrb[0].mxu0
        %1006 = vmatprep.mubr.bf16.mxu0 0
        %1007 = vmatmul.mubr.bf16.gmra.mrb[0].mxu0 %v777
        %v1008 = vpop.f32.mrb[0].mxu0
        %v1009 = vadd.f32 0.0, %v1008
        %v1010 = vpop.f32.mrb[0].mxu0
        %v1011 = vpop.f32.mrb[0].mxu0
        %v1012 = vadd.f32 0.0, %v1011
        %v1013 = vpop.f32.mrb[0].mxu0
        %1014 = vmatprep.mubr.bf16.mxu0 0
        %1015 = vmatmul.mubr.bf16.gmra.mrb[0].mxu0 %v778
        %v1016 = vpop.f32.mrb[0].mxu0
        %v1017 = vadd.f32 0.0, %v1016
        %v1018 = vpop.f32.mrb[0].mxu0
        %v1019 = vpop.f32.mrb[0].mxu0
        %v1020 = vadd.f32 0.0, %v1019
        %v1021 = vpop.f32.mrb[0].mxu0
        %1022 = vmatprep.mubr.bf16.mxu0 0
        %1023 = vmatmul.mubr.bf16.gmra.mrb[0].mxu0 %v779
        %v1024 = vpop.f32.mrb[0].mxu0
        %v1025 = vadd.f32 0.0, %v1024
        %v1026 = vpop.f32.mrb[0].mxu0
        %v1027 = vpop.f32.mrb[0].mxu0
        %v1028 = vadd.f32 0.0, %v1027
        %v1029 = vpop.f32.mrb[0].mxu0
        %1030 = vmatprep.mubr.bf16.mxu0 0
        %1031 = vmatmul.mubr.bf16.gmra.mrb[0].mxu0 %v780
        %v1032 = vpop.f32.mrb[0].mxu0
        %v1033 = vadd.f32 0.0, %v1032
        %v1034 = vpop.f32.mrb[0].mxu0
        %v1035 = vpop.f32.mrb[0].mxu0
        %v1036 = vadd.f32 0.0, %v1035
        %v1037 = vpop.f32.mrb[0].mxu0
        %1038 = vmatprep.mubr.bf16.mxu0 0
        %1039 = vmatmul.mubr.bf16.gmra.mrb[0].mxu0 %v781
        %v1040 = vpop.f32.mrb[0].mxu0
        %v1041 = vadd.f32 0.0, %v1040
        %v1042 = vpop.f32.mrb[0].mxu0
        %v1043 = vpop.f32.mrb[0].mxu0
        %v1044 = vadd.f32 0.0, %v1043
        %v1045 = vpop.f32.mrb[0].mxu0
        %1046 = vmatprep.mubr.bf16.mxu0 0
        %1047 = vmatmul.mubr.bf16.gmra.mrb[0].mxu0 %v782
        %v1048 = vpop.f32.mrb[0].mxu0
        %v1049 = vadd.f32 0.0, %v1048
        %v1050 = vpop.f32.mrb[0].mxu0
        %v1051 = vpop.f32.mrb[0].mxu0
        %v1052 = vadd.f32 0.0, %v1051
        %v1053 = vpop.f32.mrb[0].mxu0
        %1054 = vmatprep.mubr.bf16.mxu0 0
        %1055 = vmatmul.mubr.bf16.gmra.mrb[0].mxu0 %v783
        %v1056 = vpop.f32.mrb[0].mxu0
        %v1057 = vadd.f32 0.0, %v1056
        %v1058 = vpop.f32.mrb[0].mxu0
        %v1059 = vpop.f32.mrb[0].mxu0
        %v1060 = vadd.f32 0.0, %v1059
        %v1061 = vpop.f32.mrb[0].mxu0
        %1062 = vmatprep.mubr.bf16.mxu0 0
        %1063 = vmatmul.mubr.bf16.gmra.mrb[0].mxu0 %v784
        %v1064 = vpop.f32.mrb[0].mxu0
        %v1065 = vadd.f32 0.0, %v1064
        %v1066 = vpop.f32.mrb[0].mxu0
        %v1067 = vpop.f32.mrb[0].mxu0
        %v1068 = vadd.f32 0.0, %v1067
        %v1069 = vpop.f32.mrb[0].mxu0
        %1070 = vmatprep.mubr.bf16.mxu0 0
        %1071 = vmatmul.mubr.bf16.gmra.mrb[0].mxu0 %v785
        %v1072 = vpop.f32.mrb[0].mxu0
        %v1073 = vadd.f32 0.0, %v1072
        %v1074 = vpop.f32.mrb[0].mxu0
        %v1075 = vpop.f32.mrb[0].mxu0
        %v1076 = vadd.f32 0.0, %v1075
        %v1077 = vpop.f32.mrb[0].mxu0
        %1078 = vmatprep.mubr.bf16.mxu0 0
        %1079 = vmatmul.mubr.bf16.gmra.mrb[0].mxu0 %v786
        %v1080 = vpop.f32.mrb[0].mxu0
        %v1081 = vadd.f32 0.0, %v1080
        %v1082 = vpop.f32.mrb[0].mxu0
        %v1083 = vpop.f32.mrb[0].mxu0
        %v1084 = vadd.f32 0.0, %v1083
        %v1085 = vpop.f32.mrb[0].mxu0
        %1086 = vmatprep.mubr.bf16.mxu0 0
        %1087 = vmatmul.mubr.bf16.gmra.mrb[0].mxu0 %v787
        %v1088 = vpop.f32.mrb[0].mxu0
        %v1089 = vadd.f32 0.0, %v1088
        %v1090 = vpop.f32.mrb[0].mxu0
        %v1091 = vpop.f32.mrb[0].mxu0
        %v1092 = vadd.f32 0.0, %v1091
        %v1093 = vpop.f32.mrb[0].mxu0
        %1094 = vmatprep.mubr.bf16.mxu0 0
        %1095 = vmatmul.mubr.bf16.gmra.mrb[0].mxu0 %v788
        %v1096 = vpop.f32.mrb[0].mxu0
        %v1097 = vadd.f32 0.0, %v1096
        %v1098 = vpop.f32.mrb[0].mxu0
        %v1099 = vpop.f32.mrb[0].mxu0
        %v1100 = vadd.f32 0.0, %v1099
        %v1101 = vpop.f32.mrb[0].mxu0
        %1102 = vmatprep.mubr.bf16.mxu0 0
        %1103 = vmatmul.mubr.bf16.gmra.mrb[0].mxu0 %v789
        %v1104 = vpop.f32.mrb[0].mxu0
        %v1105 = vadd.f32 0.0, %v1104
        %v1106 = vpop.f32.mrb[0].mxu0
        %v1107 = vpop.f32.mrb[0].mxu0
        %v1108 = vadd.f32 0.0, %v1107
        %v1109 = vpop.f32.mrb[0].mxu0
        %1110 = vdwg.mxu0
        %v1111 = vld [vmem:[#allocation3] sm:$0x1]
        %v1112 = vmax.f32 %v857, %v873
        %v1113 = vmax.f32 %v860, %v876
        %v1114 = vmax.f32 %v865, %v881
        %v1115 = vmax.f32 %v868, %v884
        %v1116 = vmax.f32 %v1112, %v889
        %v1117 = vmax.f32 %v1113, %v892
        %v1118 = vmax.f32 %v1114, %v897
        %v1119 = vmax.f32 %v1115, %v900
        %v1120 = vmax.f32 %v1116, %v905
        %v1121 = vmax.f32 %v1117, %v908
        %v1122 = vmax.f32 %v1118, %v913
        %v1123 = vmax.f32 %v1119, %v916
        %v1124 = vmax.f32 %v1120, %v921
        %v1125 = vmax.f32 %v1121, %v924
        %v1126 = vmax.f32 %v1122, %v929
        %v1127 = vmax.f32 %v1123, %v932
        %v1128 = vmax.f32 %v1124, %v937
        %v1129 = vmax.f32 %v1125, %v940
        %v1130 = vmax.f32 %v1126, %v945
        %v1131 = vmax.f32 %v1127, %v948
        %v1132 = vmax.f32 %v1128, %v953
        %v1133 = vmax.f32 %v1129, %v956
        %v1134 = vmax.f32 %v1130, %v961
        %v1135 = vmax.f32 %v1131, %v964
        %v1136 = vmax.f32 %v1132, %v969
        %v1137 = vmax.f32 %v1133, %v972
        %v1138 = vmax.f32 %v1134, %v977
        %v1139 = vmax.f32 %v1135, %v980
        %v1140 = vmax.f32 %v1136, %v985
        %v1141 = vmax.f32 %v1137, %v988
        %v1142 = vmax.f32 %v1138, %v993
        %v1143 = vmax.f32 %v1139, %v996
        %v1144 = vmax.f32 %v1140, %v1001
        %v1145 = vmax.f32 %v1141, %v1004
        %v1146 = vmax.f32 %v1142, %v1009
        %v1147 = vmax.f32 %v1143, %v1012
        %v1148 = vmax.f32 %v1144, %v1017
        %v1149 = vmax.f32 %v1145, %v1020
        %v1150 = vmax.f32 %v1146, %v1025
        %v1151 = vmax.f32 %v1147, %v1028
        %v1152 = vmax.f32 %v1148, %v1033
        %v1153 = vmax.f32 %v1149, %v1036
        %v1154 = vmax.f32 %v1150, %v1041
        %v1155 = vmax.f32 %v1151, %v1044
        %v1156 = vmax.f32 %v1152, %v1049
        %v1157 = vmax.f32 %v1153, %v1052
        %v1158 = vmax.f32 %v1154, %v1057
        %v1159 = vmax.f32 %v1155, %v1060
        %v1160 = vmax.f32 %v1156, %v1065
        %v1161 = vmax.f32 %v1157, %v1068
        %v1162 = vmax.f32 %v1158, %v1073
        %v1163 = vmax.f32 %v1159, %v1076
        %v1164 = vmax.f32 %v1160, %v1081
        %v1165 = vmax.f32 %v1161, %v1084
        %v1166 = vmax.f32 %v1162, %v1089
        %v1167 = vmax.f32 %v1163, %v1092
        %v1168 = vmax.f32 %v1164, %v1097
        %v1169 = vmax.f32 %v1165, %v1100
        %v1170 = vmax.f32 %v1166, %v1105
        %v1171 = vmax.f32 %v1167, %v1108
        %v1172 = vmax.f32 %v1168, %v1169
        %v1173 = vmax.f32 %v1170, %v1171
        %v1174 = vmax.f32 %v1172, %v1173
        %v1175 = vrot.slane %v1174, 4
        %v1176 = vmax.f32 %v1174, %v1175
        %v1177 = vrot.slane %v1176, 2
        %v1178 = vmax.f32 %v1176, %v1177
        %v1179 = vrot.slane %v1178, 1
        %v1180 = vmax.f32 %v1178, %v1179
        %v1181 = vmax.f32 %v1111, %v1180
        %v1182 = vld [vmem:[#allocation4] sm:$0x1]
        %v1183 = vsub.f32 %v1111, %v1181
        %v1184 = vmul.f32 %v1183, 1.442695
        %v1185 = vpow.pop %v1184
        %v1186 = vmul.f32 %v1182, %v1185
        %v1188 = vlaneseq
        %v1189 = vshrl.u32 %v1188, 7
        %v1190 = vsub.s32 0, %v1189
        %v1191 = vrot.slane %v1181, %v1190
        %v1193 = vsub.f32 %v857, %v1191
        %v1194 = vsub.f32 %v860, %v1191
        %v1195 = vsub.f32 %v865, %v1191
        %v1196 = vsub.f32 %v868, %v1191
        %v1197 = vsub.f32 %v873, %v1191
        %v1198 = vsub.f32 %v876, %v1191
        %v1199 = vsub.f32 %v881, %v1191
        %v1200 = vsub.f32 %v884, %v1191
        %v1201 = vsub.f32 %v889, %v1191
        %v1202 = vsub.f32 %v892, %v1191
        %v1203 = vsub.f32 %v897, %v1191
        %v1204 = vsub.f32 %v900, %v1191
        %v1205 = vsub.f32 %v905, %v1191
        %v1206 = vsub.f32 %v908, %v1191
        %v1207 = vsub.f32 %v913, %v1191
        %v1208 = vsub.f32 %v916, %v1191
        %v1209 = vsub.f32 %v921, %v1191
        %v1210 = vsub.f32 %v924, %v1191
        %v1211 = vsub.f32 %v929, %v1191
        %v1212 = vsub.f32 %v932, %v1191
        %v1213 = vsub.f32 %v937, %v1191
        %v1214 = vsub.f32 %v940, %v1191
        %v1215 = vsub.f32 %v945, %v1191
        %v1216 = vsub.f32 %v948, %v1191
        %v1217 = vsub.f32 %v953, %v1191
        %v1218 = vsub.f32 %v956, %v1191
        %v1219 = vsub.f32 %v961, %v1191
        %v1220 = vsub.f32 %v964, %v1191
        %v1221 = vsub.f32 %v969, %v1191
        %v1222 = vsub.f32 %v972, %v1191
        %v1223 = vsub.f32 %v977, %v1191
        %v1224 = vsub.f32 %v980, %v1191
        %v1225 = vsub.f32 %v985, %v1191
        %v1226 = vsub.f32 %v988, %v1191
        %v1227 = vsub.f32 %v993, %v1191
        %v1228 = vsub.f32 %v996, %v1191
        %v1229 = vsub.f32 %v1001, %v1191
        %v1230 = vsub.f32 %v1004, %v1191
        %v1231 = vsub.f32 %v1009, %v1191
        %v1232 = vsub.f32 %v1012, %v1191
        %v1233 = vsub.f32 %v1017, %v1191
        %v1234 = vsub.f32 %v1020, %v1191
        %v1235 = vsub.f32 %v1025, %v1191
        %v1236 = vsub.f32 %v1028, %v1191
        %v1237 = vsub.f32 %v1033, %v1191
        %v1238 = vsub.f32 %v1036, %v1191
        %v1239 = vsub.f32 %v1041, %v1191
        %v1240 = vsub.f32 %v1044, %v1191
        %v1241 = vsub.f32 %v1049, %v1191
        %v1242 = vsub.f32 %v1052, %v1191
        %v1243 = vsub.f32 %v1057, %v1191
        %v1244 = vsub.f32 %v1060, %v1191
        %v1245 = vsub.f32 %v1065, %v1191
        %v1246 = vsub.f32 %v1068, %v1191
        %v1247 = vsub.f32 %v1073, %v1191
        %v1248 = vsub.f32 %v1076, %v1191
        %v1249 = vsub.f32 %v1081, %v1191
        %v1250 = vsub.f32 %v1084, %v1191
        %v1251 = vsub.f32 %v1089, %v1191
        %v1252 = vsub.f32 %v1092, %v1191
        %v1253 = vsub.f32 %v1097, %v1191
        %v1254 = vsub.f32 %v1100, %v1191
        %v1255 = vsub.f32 %v1105, %v1191
        %v1256 = vsub.f32 %v1108, %v1191
        %v1257 = vmul.f32 %v1193, 1.442695
        %v1258 = vpow.pop %v1257
        %v1259 = vmul.f32 %v1194, 1.442695
        %v1260 = vpow.pop %v1259
        %v1261 = vmul.f32 %v1195, 1.442695
        %v1262 = vpow.pop %v1261
        %v1263 = vmul.f32 %v1196, 1.442695
        %v1264 = vpow.pop %v1263
        %v1265 = vmul.f32 %v1197, 1.442695
        %v1266 = vpow.pop %v1265
        %v1267 = vmul.f32 %v1198, 1.442695
        %v1268 = vpow.pop %v1267
        %v1269 = vmul.f32 %v1199, 1.442695
        %v1270 = vpow.pop %v1269
        %v1271 = vmul.f32 %v1200, 1.442695
        %v1272 = vpow.pop %v1271
        %v1273 = vmul.f32 %v1201, 1.442695
        %v1274 = vpow.pop %v1273
        %v1275 = vmul.f32 %v1202, 1.442695
        %v1276 = vpow.pop %v1275
        %v1277 = vmul.f32 %v1203, 1.442695
        %v1278 = vpow.pop %v1277
        %v1279 = vmul.f32 %v1204, 1.442695
        %v1280 = vpow.pop %v1279
        %v1281 = vmul.f32 %v1205, 1.442695
        %v1282 = vpow.pop %v1281
        %v1283 = vmul.f32 %v1206, 1.442695
        %v1284 = vpow.pop %v1283
        %v1285 = vmul.f32 %v1207, 1.442695
        %v1286 = vpow.pop %v1285
        %v1287 = vmul.f32 %v1208, 1.442695
        %v1288 = vpow.pop %v1287
        %v1289 = vmul.f32 %v1209, 1.442695
        %v1290 = vpow.pop %v1289
        %v1291 = vmul.f32 %v1210, 1.442695
        %v1292 = vpow.pop %v1291
        %v1293 = vmul.f32 %v1211, 1.442695
        %v1294 = vpow.pop %v1293
        %v1295 = vmul.f32 %v1212, 1.442695
        %v1296 = vpow.pop %v1295
        %v1297 = vmul.f32 %v1213, 1.442695
        %v1298 = vpow.pop %v1297
        %v1299 = vmul.f32 %v1214, 1.442695
        %v1300 = vpow.pop %v1299
        %v1301 = vmul.f32 %v1215, 1.442695
        %v1302 = vpow.pop %v1301
        %v1303 = vmul.f32 %v1216, 1.442695
        %v1304 = vpow.pop %v1303
        %v1305 = vmul.f32 %v1217, 1.442695
        %v1306 = vpow.pop %v1305
        %v1307 = vmul.f32 %v1218, 1.442695
        %v1308 = vpow.pop %v1307
        %v1309 = vmul.f32 %v1219, 1.442695
        %v1310 = vpow.pop %v1309
        %v1311 = vmul.f32 %v1220, 1.442695
        %v1312 = vpow.pop %v1311
        %v1313 = vmul.f32 %v1221, 1.442695
        %v1314 = vpow.pop %v1313
        %v1315 = vmul.f32 %v1222, 1.442695
        %v1316 = vpow.pop %v1315
        %v1317 = vmul.f32 %v1223, 1.442695
        %v1318 = vpow.pop %v1317
        %v1319 = vmul.f32 %v1224, 1.442695
        %v1320 = vpow.pop %v1319
        %v1321 = vmul.f32 %v1225, 1.442695
        %v1322 = vpow.pop %v1321
        %v1323 = vmul.f32 %v1226, 1.442695
        %v1324 = vpow.pop %v1323
        %v1325 = vmul.f32 %v1227, 1.442695
        %v1326 = vpow.pop %v1325
        %v1327 = vmul.f32 %v1228, 1.442695
        %v1328 = vpow.pop %v1327
        %v1329 = vmul.f32 %v1229, 1.442695
        %v1330 = vpow.pop %v1329
        %v1331 = vmul.f32 %v1230, 1.442695
        %v1332 = vpow.pop %v1331
        %v1333 = vmul.f32 %v1231, 1.442695
        %v1334 = vpow.pop %v1333
        %v1335 = vmul.f32 %v1232, 1.442695
        %v1336 = vpow.pop %v1335
        %v1337 = vmul.f32 %v1233, 1.442695
        %v1338 = vpow.pop %v1337
        %v1339 = vmul.f32 %v1234, 1.442695
        %v1340 = vpow.pop %v1339
        %v1341 = vmul.f32 %v1235, 1.442695
        %v1342 = vpow.pop %v1341
        %v1343 = vmul.f32 %v1236, 1.442695
        %v1344 = vpow.pop %v1343
        %v1345 = vmul.f32 %v1237, 1.442695
        %v1346 = vpow.pop %v1345
        %v1347 = vmul.f32 %v1238, 1.442695
        %v1348 = vpow.pop %v1347
        %v1349 = vmul.f32 %v1239, 1.442695
        %v1350 = vpow.pop %v1349
        %v1351 = vmul.f32 %v1240, 1.442695
        %v1352 = vpow.pop %v1351
        %v1353 = vmul.f32 %v1241, 1.442695
        %v1354 = vpow.pop %v1353
        %v1355 = vmul.f32 %v1242, 1.442695
        %v1356 = vpow.pop %v1355
        %v1357 = vmul.f32 %v1243, 1.442695
        %v1358 = vpow.pop %v1357
        %v1359 = vmul.f32 %v1244, 1.442695
        %v1360 = vpow.pop %v1359
        %v1361 = vmul.f32 %v1245, 1.442695
        %v1362 = vpow.pop %v1361
        %v1363 = vmul.f32 %v1246, 1.442695
        %v1364 = vpow.pop %v1363
        %v1365 = vmul.f32 %v1247, 1.442695
        %v1366 = vpow.pop %v1365
        %v1367 = vmul.f32 %v1248, 1.442695
        %v1368 = vpow.pop %v1367
        %v1369 = vmul.f32 %v1249, 1.442695
        %v1370 = vpow.pop %v1369
        %v1371 = vmul.f32 %v1250, 1.442695
        %v1372 = vpow.pop %v1371
        %v1373 = vmul.f32 %v1251, 1.442695
        %v1374 = vpow.pop %v1373
        %v1375 = vmul.f32 %v1252, 1.442695
        %v1376 = vpow.pop %v1375
        %v1377 = vmul.f32 %v1253, 1.442695
        %v1378 = vpow.pop %v1377
        %v1379 = vmul.f32 %v1254, 1.442695
        %v1380 = vpow.pop %v1379
        %v1381 = vmul.f32 %v1255, 1.442695
        %v1382 = vpow.pop %v1381
        %v1383 = vmul.f32 %v1256, 1.442695
        %v1384 = vpow.pop %v1383
        %v1385 = vadd.f32 %v1258, %v1260
        %v1386 = vadd.f32 %v1385, %v1262
        %v1387 = vadd.f32 %v1386, %v1264
        %v1388 = vadd.f32 %v1387, %v1266
        %v1389 = vadd.f32 %v1388, %v1268
        %v1390 = vadd.f32 %v1389, %v1270
        %v1391 = vadd.f32 %v1390, %v1272
        %v1392 = vadd.f32 %v1391, %v1274
        %v1393 = vadd.f32 %v1392, %v1276
        %v1394 = vadd.f32 %v1393, %v1278
        %v1395 = vadd.f32 %v1394, %v1280
        %v1396 = vadd.f32 %v1395, %v1282
        %v1397 = vadd.f32 %v1396, %v1284
        %v1398 = vadd.f32 %v1397, %v1286
        %v1399 = vadd.f32 %v1398, %v1288
        %v1400 = vadd.f32 %v1399, %v1290
        %v1401 = vadd.f32 %v1400, %v1292
        %v1402 = vadd.f32 %v1401, %v1294
        %v1403 = vadd.f32 %v1402, %v1296
        %v1404 = vadd.f32 %v1403, %v1298
        %v1405 = vadd.f32 %v1404, %v1300
        %v1406 = vadd.f32 %v1405, %v1302
        %v1407 = vadd.f32 %v1406, %v1304
        %v1408 = vadd.f32 %v1407, %v1306
        %v1409 = vadd.f32 %v1408, %v1308
        %v1410 = vadd.f32 %v1409, %v1310
        %v1411 = vadd.f32 %v1410, %v1312
        %v1412 = vadd.f32 %v1411, %v1314
        %v1413 = vadd.f32 %v1412, %v1316
        %v1414 = vadd.f32 %v1413, %v1318
        %v1415 = vadd.f32 %v1414, %v1320
        %v1416 = vadd.f32 %v1415, %v1322
        %v1417 = vadd.f32 %v1416, %v1324
        %v1418 = vadd.f32 %v1417, %v1326
        %v1419 = vadd.f32 %v1418, %v1328
        %v1420 = vadd.f32 %v1419, %v1330
        %v1421 = vadd.f32 %v1420, %v1332
        %v1422 = vadd.f32 %v1421, %v1334
        %v1423 = vadd.f32 %v1422, %v1336
        %v1424 = vadd.f32 %v1423, %v1338
        %v1425 = vadd.f32 %v1424, %v1340
        %v1426 = vadd.f32 %v1425, %v1342
        %v1427 = vadd.f32 %v1426, %v1344
        %v1428 = vadd.f32 %v1427, %v1346
        %v1429 = vadd.f32 %v1428, %v1348
        %v1430 = vadd.f32 %v1429, %v1350
        %v1431 = vadd.f32 %v1430, %v1352
        %v1432 = vadd.f32 %v1431, %v1354
        %v1433 = vadd.f32 %v1432, %v1356
        %v1434 = vadd.f32 %v1433, %v1358
        %v1435 = vadd.f32 %v1434, %v1360
        %v1436 = vadd.f32 %v1435, %v1362
        %v1437 = vadd.f32 %v1436, %v1364
        %v1438 = vadd.f32 %v1437, %v1366
        %v1439 = vadd.f32 %v1438, %v1368
        %v1440 = vadd.f32 %v1439, %v1370
        %v1441 = vadd.f32 %v1440, %v1372
        %v1442 = vadd.f32 %v1441, %v1374
        %v1443 = vadd.f32 %v1442, %v1376
        %v1444 = vadd.f32 %v1443, %v1378
        %v1445 = vadd.f32 %v1444, %v1380
        %v1446 = vadd.f32 %v1445, %v1382
        %v1447 = vadd.f32 %v1446, %v1384
        %v1448 = vrot.slane %v1447, 4
        %v1449 = vadd.f32 %v1447, %v1448
        %v1450 = vrot.slane %v1449, 2
        %v1451 = vadd.f32 %v1449, %v1450
        %v1452 = vrot.slane %v1451, 1
        %v1453 = vadd.f32 %v1451, %v1452
        %v1454 = vadd.f32 %v1186, %v1453
        %1455 = vst [vmem:[#allocation4] sm:$0x1] %v1454
        %1456 = vst [vmem:[#allocation3] sm:$0x1] %v1181
        %v1457 = vlaneseq
        %v1458 = vshrl.u32 %v1457, 7
        %v1459 = vadd.s32 %v1458, 8
        %v1460 = vadd.s32 %v1458, 16
        %v1461 = vadd.s32 %v1458, 24
        %v1462 = vadd.s32 %v1458, 32
        %v1463 = vadd.s32 %v1458, 40
        %v1464 = vadd.s32 %v1458, 48
        %v1465 = vadd.s32 %v1458, 56
        %v1466 = vadd.s32 %v1458, 64
        %v1467 = vadd.s32 %v1458, 72
        %v1468 = vadd.s32 %v1458, 80
        %v1469 = vadd.s32 %v1458, 88
        %v1470 = vadd.s32 %v1458, 96
        %v1471 = vadd.s32 %v1458, 104
        %v1472 = vadd.s32 %v1458, 112
        %v1473 = vadd.s32 %v1458, 120
        %v1474 = vadd.s32 %v1458, 128
        %v1475 = vadd.s32 %v1458, 136
        %v1476 = vadd.s32 %v1458, 144
        %v1477 = vadd.s32 %v1458, 152
        %v1478 = vadd.s32 %v1458, 160
        %v1479 = vadd.s32 %v1458, 168
        %v1480 = vadd.s32 %v1458, 176
        %v1481 = vadd.s32 %v1458, 184
        %v1482 = vadd.s32 %v1458, 192
        %v1483 = vadd.s32 %v1458, 200
        %v1484 = vadd.s32 %v1458, 208
        %v1485 = vadd.s32 %v1458, 216
        %v1486 = vadd.s32 %v1458, 224
        %v1487 = vadd.s32 %v1458, 232
        %v1488 = vadd.s32 %v1458, 240
        %v1489 = vadd.s32 %v1458, 248
        %v1490 = vadd.s32 %v1458, 256
        %v1491 = vadd.s32 %v1458, 264
        %v1492 = vadd.s32 %v1458, 272
        %v1493 = vadd.s32 %v1458, 280
        %v1494 = vadd.s32 %v1458, 288
        %v1495 = vadd.s32 %v1458, 296
        %v1496 = vadd.s32 %v1458, 304
        %v1497 = vadd.s32 %v1458, 312
        %v1498 = vadd.s32 %v1458, 320
        %v1499 = vadd.s32 %v1458, 328
        %v1500 = vadd.s32 %v1458, 336
        %v1501 = vadd.s32 %v1458, 344
        %v1502 = vadd.s32 %v1458, 352
        %v1503 = vadd.s32 %v1458, 360
        %v1504 = vadd.s32 %v1458, 368
        %v1505 = vadd.s32 %v1458, 376
        %v1506 = vadd.s32 %v1458, 384
        %v1507 = vadd.s32 %v1458, 392
        %v1508 = vadd.s32 %v1458, 400
        %v1509 = vadd.s32 %v1458, 408
        %v1510 = vadd.s32 %v1458, 416
        %v1511 = vadd.s32 %v1458, 424
        %v1512 = vadd.s32 %v1458, 432
        %v1513 = vadd.s32 %v1458, 440
        %v1514 = vadd.s32 %v1458, 448
        %v1515 = vadd.s32 %v1458, 456
        %v1516 = vadd.s32 %v1458, 464
        %v1517 = vadd.s32 %v1458, 472
        %v1518 = vadd.s32 %v1458, 480
        %v1519 = vadd.s32 %v1458, 488
        %v1520 = vadd.s32 %v1458, 496
        %v1521 = vadd.s32 %v1458, 504
        %s1522 = smul.u32 %s27, 512
        %v1523 = vstv %s1522
        %v1524 = vadd.s32 %v1458, %v1523
        %v1525 = vadd.s32 %v1459, %v1523
        %v1526 = vadd.s32 %v1460, %v1523
        %v1527 = vadd.s32 %v1461, %v1523
        %v1528 = vadd.s32 %v1462, %v1523
        %v1529 = vadd.s32 %v1463, %v1523
        %v1530 = vadd.s32 %v1464, %v1523
        %v1531 = vadd.s32 %v1465, %v1523
        %v1532 = vadd.s32 %v1466, %v1523
        %v1533 = vadd.s32 %v1467, %v1523
        %v1534 = vadd.s32 %v1468, %v1523
        %v1535 = vadd.s32 %v1469, %v1523
        %v1536 = vadd.s32 %v1470, %v1523
        %v1537 = vadd.s32 %v1471, %v1523
        %v1538 = vadd.s32 %v1472, %v1523
        %v1539 = vadd.s32 %v1473, %v1523
        %v1540 = vadd.s32 %v1474, %v1523
        %v1541 = vadd.s32 %v1475, %v1523
        %v1542 = vadd.s32 %v1476, %v1523
        %v1543 = vadd.s32 %v1477, %v1523
        %v1544 = vadd.s32 %v1478, %v1523
        %v1545 = vadd.s32 %v1479, %v1523
        %v1546 = vadd.s32 %v1480, %v1523
        %v1547 = vadd.s32 %v1481, %v1523
        %v1548 = vadd.s32 %v1482, %v1523
        %v1549 = vadd.s32 %v1483, %v1523
        %v1550 = vadd.s32 %v1484, %v1523
        %v1551 = vadd.s32 %v1485, %v1523
        %v1552 = vadd.s32 %v1486, %v1523
        %v1553 = vadd.s32 %v1487, %v1523
        %v1554 = vadd.s32 %v1488, %v1523
        %v1555 = vadd.s32 %v1489, %v1523
        %v1556 = vadd.s32 %v1490, %v1523
        %v1557 = vadd.s32 %v1491, %v1523
        %v1558 = vadd.s32 %v1492, %v1523
        %v1559 = vadd.s32 %v1493, %v1523
        %v1560 = vadd.s32 %v1494, %v1523
        %v1561 = vadd.s32 %v1495, %v1523
        %v1562 = vadd.s32 %v1496, %v1523
        %v1563 = vadd.s32 %v1497, %v1523
        %v1564 = vadd.s32 %v1498, %v1523
        %v1565 = vadd.s32 %v1499, %v1523
        %v1566 = vadd.s32 %v1500, %v1523
        %v1567 = vadd.s32 %v1501, %v1523
        %v1568 = vadd.s32 %v1502, %v1523
        %v1569 = vadd.s32 %v1503, %v1523
        %v1570 = vadd.s32 %v1504, %v1523
        %v1571 = vadd.s32 %v1505, %v1523
        %v1572 = vadd.s32 %v1506, %v1523
        %v1573 = vadd.s32 %v1507, %v1523
        %v1574 = vadd.s32 %v1508, %v1523
        %v1575 = vadd.s32 %v1509, %v1523
        %v1576 = vadd.s32 %v1510, %v1523
        %v1577 = vadd.s32 %v1511, %v1523
        %v1578 = vadd.s32 %v1512, %v1523
        %v1579 = vadd.s32 %v1513, %v1523
        %v1580 = vadd.s32 %v1514, %v1523
        %v1581 = vadd.s32 %v1515, %v1523
        %v1582 = vadd.s32 %v1516, %v1523
        %v1583 = vadd.s32 %v1517, %v1523
        %v1584 = vadd.s32 %v1518, %v1523
        %v1585 = vadd.s32 %v1519, %v1523
        %v1586 = vadd.s32 %v1520, %v1523
        %v1587 = vadd.s32 %v1521, %v1523
        %v1588 = vld [vmem:[%s292] sm:$0x1]
        %v1589 = vlaneseq
        %v1590 = vshrl.u32 %v1589, 7
        %v1591 = vsub.s32 0, %v1590
        %v1592 = vrot.slane %v1588, %v1591
        %vm1593 = vcmp.eq.s32.totalorder %v1524, %v1592
        %vm1594 = vcmp.eq.s32.totalorder %v1525, %v1592
        %vm1595 = vcmp.eq.s32.totalorder %v1526, %v1592
        %vm1596 = vcmp.eq.s32.totalorder %v1527, %v1592
        %vm1597 = vcmp.eq.s32.totalorder %v1528, %v1592
        %vm1598 = vcmp.eq.s32.totalorder %v1529, %v1592
        %vm1599 = vcmp.eq.s32.totalorder %v1530, %v1592
        %vm1600 = vcmp.eq.s32.totalorder %v1531, %v1592
        %vm1601 = vcmp.eq.s32.totalorder %v1532, %v1592
        %vm1602 = vcmp.eq.s32.totalorder %v1533, %v1592
        %vm1603 = vcmp.eq.s32.totalorder %v1534, %v1592
        %vm1604 = vcmp.eq.s32.totalorder %v1535, %v1592
        %vm1605 = vcmp.eq.s32.totalorder %v1536, %v1592
        %vm1606 = vcmp.eq.s32.totalorder %v1537, %v1592
        %vm1607 = vcmp.eq.s32.totalorder %v1538, %v1592
        %vm1608 = vcmp.eq.s32.totalorder %v1539, %v1592
        %vm1609 = vcmp.eq.s32.totalorder %v1540, %v1592
        %vm1610 = vcmp.eq.s32.totalorder %v1541, %v1592
        %vm1611 = vcmp.eq.s32.totalorder %v1542, %v1592
        %vm1612 = vcmp.eq.s32.totalorder %v1543, %v1592
        %vm1613 = vcmp.eq.s32.totalorder %v1544, %v1592
        %vm1614 = vcmp.eq.s32.totalorder %v1545, %v1592
        %vm1615 = vcmp.eq.s32.totalorder %v1546, %v1592
        %vm1616 = vcmp.eq.s32.totalorder %v1547, %v1592
        %vm1617 = vcmp.eq.s32.totalorder %v1548, %v1592
        %vm1618 = vcmp.eq.s32.totalorder %v1549, %v1592
        %vm1619 = vcmp.eq.s32.totalorder %v1550, %v1592
        %vm1620 = vcmp.eq.s32.totalorder %v1551, %v1592
        %vm1621 = vcmp.eq.s32.totalorder %v1552, %v1592
        %vm1622 = vcmp.eq.s32.totalorder %v1553, %v1592
        %vm1623 = vcmp.eq.s32.totalorder %v1554, %v1592
        %vm1624 = vcmp.eq.s32.totalorder %v1555, %v1592
        %vm1625 = vcmp.eq.s32.totalorder %v1556, %v1592
        %vm1626 = vcmp.eq.s32.totalorder %v1557, %v1592
        %vm1627 = vcmp.eq.s32.totalorder %v1558, %v1592
        %vm1628 = vcmp.eq.s32.totalorder %v1559, %v1592
        %vm1629 = vcmp.eq.s32.totalorder %v1560, %v1592
        %vm1630 = vcmp.eq.s32.totalorder %v1561, %v1592
        %vm1631 = vcmp.eq.s32.totalorder %v1562, %v1592
        %vm1632 = vcmp.eq.s32.totalorder %v1563, %v1592
        %vm1633 = vcmp.eq.s32.totalorder %v1564, %v1592
        %vm1634 = vcmp.eq.s32.totalorder %v1565, %v1592
        %vm1635 = vcmp.eq.s32.totalorder %v1566, %v1592
        %vm1636 = vcmp.eq.s32.totalorder %v1567, %v1592
        %vm1637 = vcmp.eq.s32.totalorder %v1568, %v1592
        %vm1638 = vcmp.eq.s32.totalorder %v1569, %v1592
        %vm1639 = vcmp.eq.s32.totalorder %v1570, %v1592
        %vm1640 = vcmp.eq.s32.totalorder %v1571, %v1592
        %vm1641 = vcmp.eq.s32.totalorder %v1572, %v1592
        %vm1642 = vcmp.eq.s32.totalorder %v1573, %v1592
        %vm1643 = vcmp.eq.s32.totalorder %v1574, %v1592
        %vm1644 = vcmp.eq.s32.totalorder %v1575, %v1592
        %vm1645 = vcmp.eq.s32.totalorder %v1576, %v1592
        %vm1646 = vcmp.eq.s32.totalorder %v1577, %v1592
        %vm1647 = vcmp.eq.s32.totalorder %v1578, %v1592
        %vm1648 = vcmp.eq.s32.totalorder %v1579, %v1592
        %vm1649 = vcmp.eq.s32.totalorder %v1580, %v1592
        %vm1650 = vcmp.eq.s32.totalorder %v1581, %v1592
        %vm1651 = vcmp.eq.s32.totalorder %v1582, %v1592
        %vm1652 = vcmp.eq.s32.totalorder %v1583, %v1592
        %vm1653 = vcmp.eq.s32.totalorder %v1584, %v1592
        %vm1654 = vcmp.eq.s32.totalorder %v1585, %v1592
        %vm1655 = vcmp.eq.s32.totalorder %v1586, %v1592
        %vm1656 = vcmp.eq.s32.totalorder %v1587, %v1592
        %v1657 = vsel %vm1593, 1, 0
        %v1658 = vsel %vm1594, 1, 0
        %v1659 = vsel %vm1595, 1, 0
        %v1660 = vsel %vm1596, 1, 0
        %v1661 = vsel %vm1597, 1, 0
        %v1662 = vsel %vm1598, 1, 0
        %v1663 = vsel %vm1599, 1, 0
        %v1664 = vsel %vm1600, 1, 0
        %v1665 = vsel %vm1601, 1, 0
        %v1666 = vsel %vm1602, 1, 0
        %v1667 = vsel %vm1603, 1, 0
        %v1668 = vsel %vm1604, 1, 0
        %v1669 = vsel %vm1605, 1, 0
        %v1670 = vsel %vm1606, 1, 0
        %v1671 = vsel %vm1607, 1, 0
        %v1672 = vsel %vm1608, 1, 0
        %v1673 = vsel %vm1609, 1, 0
        %v1674 = vsel %vm1610, 1, 0
        %v1675 = vsel %vm1611, 1, 0
        %v1676 = vsel %vm1612, 1, 0
        %v1677 = vsel %vm1613, 1, 0
        %v1678 = vsel %vm1614, 1, 0
        %v1679 = vsel %vm1615, 1, 0
        %v1680 = vsel %vm1616, 1, 0
        %v1681 = vsel %vm1617, 1, 0
        %v1682 = vsel %vm1618, 1, 0
        %v1683 = vsel %vm1619, 1, 0
        %v1684 = vsel %vm1620, 1, 0
        %v1685 = vsel %vm1621, 1, 0
        %v1686 = vsel %vm1622, 1, 0
        %v1687 = vsel %vm1623, 1, 0
        %v1688 = vsel %vm1624, 1, 0
        %v1689 = vsel %vm1625, 1, 0
        %v1690 = vsel %vm1626, 1, 0
        %v1691 = vsel %vm1627, 1, 0
        %v1692 = vsel %vm1628, 1, 0
        %v1693 = vsel %vm1629, 1, 0
        %v1694 = vsel %vm1630, 1, 0
        %v1695 = vsel %vm1631, 1, 0
        %v1696 = vsel %vm1632, 1, 0
        %v1697 = vsel %vm1633, 1, 0
        %v1698 = vsel %vm1634, 1, 0
        %v1699 = vsel %vm1635, 1, 0
        %v1700 = vsel %vm1636, 1, 0
        %v1701 = vsel %vm1637, 1, 0
        %v1702 = vsel %vm1638, 1, 0
        %v1703 = vsel %vm1639, 1, 0
        %v1704 = vsel %vm1640, 1, 0
        %v1705 = vsel %vm1641, 1, 0
        %v1706 = vsel %vm1642, 1, 0
        %v1707 = vsel %vm1643, 1, 0
        %v1708 = vsel %vm1644, 1, 0
        %v1709 = vsel %vm1645, 1, 0
        %v1710 = vsel %vm1646, 1, 0
        %v1711 = vsel %vm1647, 1, 0
        %v1712 = vsel %vm1648, 1, 0
        %v1713 = vsel %vm1649, 1, 0
        %v1714 = vsel %vm1650, 1, 0
        %v1715 = vsel %vm1651, 1, 0
        %v1716 = vsel %vm1652, 1, 0
        %v1717 = vsel %vm1653, 1, 0
        %v1718 = vsel %vm1654, 1, 0
        %v1719 = vsel %vm1655, 1, 0
        %v1720 = vsel %vm1656, 1, 0
        %v1721 = vcvt.s32.f32 %v1657
        %v1722 = vcvt.s32.f32 %v1658
        %v1723 = vcvt.s32.f32 %v1659
        %v1724 = vcvt.s32.f32 %v1660
        %v1725 = vcvt.s32.f32 %v1661
        %v1726 = vcvt.s32.f32 %v1662
        %v1727 = vcvt.s32.f32 %v1663
        %v1728 = vcvt.s32.f32 %v1664
        %v1729 = vcvt.s32.f32 %v1665
        %v1730 = vcvt.s32.f32 %v1666
        %v1731 = vcvt.s32.f32 %v1667
        %v1732 = vcvt.s32.f32 %v1668
        %v1733 = vcvt.s32.f32 %v1669
        %v1734 = vcvt.s32.f32 %v1670
        %v1735 = vcvt.s32.f32 %v1671
        %v1736 = vcvt.s32.f32 %v1672
        %v1737 = vcvt.s32.f32 %v1673
        %v1738 = vcvt.s32.f32 %v1674
        %v1739 = vcvt.s32.f32 %v1675
        %v1740 = vcvt.s32.f32 %v1676
        %v1741 = vcvt.s32.f32 %v1677
        %v1742 = vcvt.s32.f32 %v1678
        %v1743 = vcvt.s32.f32 %v1679
        %v1744 = vcvt.s32.f32 %v1680
        %v1745 = vcvt.s32.f32 %v1681
        %v1746 = vcvt.s32.f32 %v1682
        %v1747 = vcvt.s32.f32 %v1683
        %v1748 = vcvt.s32.f32 %v1684
        %v1749 = vcvt.s32.f32 %v1685
        %v1750 = vcvt.s32.f32 %v1686
        %v1751 = vcvt.s32.f32 %v1687
        %v1752 = vcvt.s32.f32 %v1688
        %v1753 = vcvt.s32.f32 %v1689
        %v1754 = vcvt.s32.f32 %v1690
        %v1755 = vcvt.s32.f32 %v1691
        %v1756 = vcvt.s32.f32 %v1692
        %v1757 = vcvt.s32.f32 %v1693
        %v1758 = vcvt.s32.f32 %v1694
        %v1759 = vcvt.s32.f32 %v1695
        %v1760 = vcvt.s32.f32 %v1696
        %v1761 = vcvt.s32.f32 %v1697
        %v1762 = vcvt.s32.f32 %v1698
        %v1763 = vcvt.s32.f32 %v1699
        %v1764 = vcvt.s32.f32 %v1700
        %v1765 = vcvt.s32.f32 %v1701
        %v1766 = vcvt.s32.f32 %v1702
        %v1767 = vcvt.s32.f32 %v1703
        %v1768 = vcvt.s32.f32 %v1704
        %v1769 = vcvt.s32.f32 %v1705
        %v1770 = vcvt.s32.f32 %v1706
        %v1771 = vcvt.s32.f32 %v1707
        %v1772 = vcvt.s32.f32 %v1708
        %v1773 = vcvt.s32.f32 %v1709
        %v1774 = vcvt.s32.f32 %v1710
        %v1775 = vcvt.s32.f32 %v1711
        %v1776 = vcvt.s32.f32 %v1712
        %v1777 = vcvt.s32.f32 %v1713
        %v1778 = vcvt.s32.f32 %v1714
        %v1779 = vcvt.s32.f32 %v1715
        %v1780 = vcvt.s32.f32 %v1716
        %v1781 = vcvt.s32.f32 %v1717
        %v1782 = vcvt.s32.f32 %v1718
        %v1783 = vcvt.s32.f32 %v1719
        %v1784 = vcvt.s32.f32 %v1720
        %v1785 = vld [vmem:[#allocation5] sm:$0x1]
        %v1786 = vmul.f32 %v857, %v1721
        %v1787 = vmul.f32 %v860, %v1722
        %v1788 = vmul.f32 %v865, %v1723
        %v1789 = vmul.f32 %v868, %v1724
        %v1790 = vmul.f32 %v873, %v1725
        %v1791 = vmul.f32 %v876, %v1726
        %v1792 = vmul.f32 %v881, %v1727
        %v1793 = vmul.f32 %v884, %v1728
        %v1794 = vmul.f32 %v889, %v1729
        %v1795 = vmul.f32 %v892, %v1730
        %v1796 = vmul.f32 %v897, %v1731
        %v1797 = vmul.f32 %v900, %v1732
        %v1798 = vmul.f32 %v905, %v1733
        %v1799 = vmul.f32 %v908, %v1734
        %v1800 = vmul.f32 %v913, %v1735
        %v1801 = vmul.f32 %v916, %v1736
        %v1802 = vmul.f32 %v921, %v1737
        %v1803 = vmul.f32 %v924, %v1738
        %v1804 = vmul.f32 %v929, %v1739
        %v1805 = vmul.f32 %v932, %v1740
        %v1806 = vmul.f32 %v937, %v1741
        %v1807 = vmul.f32 %v940, %v1742
        %v1808 = vmul.f32 %v945, %v1743
        %v1809 = vmul.f32 %v948, %v1744
        %v1810 = vmul.f32 %v953, %v1745
        %v1811 = vmul.f32 %v956, %v1746
        %v1812 = vmul.f32 %v961, %v1747
        %v1813 = vmul.f32 %v964, %v1748
        %v1814 = vmul.f32 %v969, %v1749
        %v1815 = vmul.f32 %v972, %v1750
        %v1816 = vmul.f32 %v977, %v1751
        %v1817 = vmul.f32 %v980, %v1752
        %v1818 = vmul.f32 %v985, %v1753
        %v1819 = vmul.f32 %v988, %v1754
        %v1820 = vmul.f32 %v993, %v1755
        %v1821 = vmul.f32 %v996, %v1756
        %v1822 = vmul.f32 %v1001, %v1757
        %v1823 = vmul.f32 %v1004, %v1758
        %v1824 = vmul.f32 %v1009, %v1759
        %v1825 = vmul.f32 %v1012, %v1760
        %v1826 = vmul.f32 %v1017, %v1761
        %v1827 = vmul.f32 %v1020, %v1762
        %v1828 = vmul.f32 %v1025, %v1763
        %v1829 = vmul.f32 %v1028, %v1764
        %v1830 = vmul.f32 %v1033, %v1765
        %v1831 = vmul.f32 %v1036, %v1766
        %v1832 = vmul.f32 %v1041, %v1767
        %v1833 = vmul.f32 %v1044, %v1768
        %v1834 = vmul.f32 %v1049, %v1769
        %v1835 = vmul.f32 %v1052, %v1770
        %v1836 = vmul.f32 %v1057, %v1771
        %v1837 = vmul.f32 %v1060, %v1772
        %v1838 = vmul.f32 %v1065, %v1773
        %v1839 = vmul.f32 %v1068, %v1774
        %v1840 = vmul.f32 %v1073, %v1775
        %v1841 = vmul.f32 %v1076, %v1776
        %v1842 = vmul.f32 %v1081, %v1777
        %v1843 = vmul.f32 %v1084, %v1778
        %v1844 = vmul.f32 %v1089, %v1779
        %v1845 = vmul.f32 %v1092, %v1780
        %v1846 = vmul.f32 %v1097, %v1781
        %v1847 = vmul.f32 %v1100, %v1782
        %v1848 = vmul.f32 %v1105, %v1783
        %v1849 = vmul.f32 %v1108, %v1784
        %v1850 = vadd.f32 %v1786, %v1787
        %v1851 = vadd.f32 %v1850, %v1788
        %v1852 = vadd.f32 %v1851, %v1789
        %v1853 = vadd.f32 %v1852, %v1790
        %v1854 = vadd.f32 %v1853, %v1791
        %v1855 = vadd.f32 %v1854, %v1792
        %v1856 = vadd.f32 %v1855, %v1793
        %v1857 = vadd.f32 %v1856, %v1794
        %v1858 = vadd.f32 %v1857, %v1795
        %v1859 = vadd.f32 %v1858, %v1796
        %v1860 = vadd.f32 %v1859, %v1797
        %v1861 = vadd.f32 %v1860, %v1798
        %v1862 = vadd.f32 %v1861, %v1799
        %v1863 = vadd.f32 %v1862, %v1800
        %v1864 = vadd.f32 %v1863, %v1801
        %v1865 = vadd.f32 %v1864, %v1802
        %v1866 = vadd.f32 %v1865, %v1803
        %v1867 = vadd.f32 %v1866, %v1804
        %v1868 = vadd.f32 %v1867, %v1805
        %v1869 = vadd.f32 %v1868, %v1806
        %v1870 = vadd.f32 %v1869, %v1807
        %v1871 = vadd.f32 %v1870, %v1808
        %v1872 = vadd.f32 %v1871, %v1809
        %v1873 = vadd.f32 %v1872, %v1810
        %v1874 = vadd.f32 %v1873, %v1811
        %v1875 = vadd.f32 %v1874, %v1812
        %v1876 = vadd.f32 %v1875, %v1813
        %v1877 = vadd.f32 %v1876, %v1814
        %v1878 = vadd.f32 %v1877, %v1815
        %v1879 = vadd.f32 %v1878, %v1816
        %v1880 = vadd.f32 %v1879, %v1817
        %v1881 = vadd.f32 %v1880, %v1818
        %v1882 = vadd.f32 %v1881, %v1819
        %v1883 = vadd.f32 %v1882, %v1820
        %v1884 = vadd.f32 %v1883, %v1821
        %v1885 = vadd.f32 %v1884, %v1822
        %v1886 = vadd.f32 %v1885, %v1823
        %v1887 = vadd.f32 %v1886, %v1824
        %v1888 = vadd.f32 %v1887, %v1825
        %v1889 = vadd.f32 %v1888, %v1826
        %v1890 = vadd.f32 %v1889, %v1827
        %v1891 = vadd.f32 %v1890, %v1828
        %v1892 = vadd.f32 %v1891, %v1829
        %v1893 = vadd.f32 %v1892, %v1830
        %v1894 = vadd.f32 %v1893, %v1831
        %v1895 = vadd.f32 %v1894, %v1832
        %v1896 = vadd.f32 %v1895, %v1833
        %v1897 = vadd.f32 %v1896, %v1834
        %v1898 = vadd.f32 %v1897, %v1835
        %v1899 = vadd.f32 %v1898, %v1836
        %v1900 = vadd.f32 %v1899, %v1837
        %v1901 = vadd.f32 %v1900, %v1838
        %v1902 = vadd.f32 %v1901, %v1839
        %v1903 = vadd.f32 %v1902, %v1840
        %v1904 = vadd.f32 %v1903, %v1841
        %v1905 = vadd.f32 %v1904, %v1842
        %v1906 = vadd.f32 %v1905, %v1843
        %v1907 = vadd.f32 %v1906, %v1844
        %v1908 = vadd.f32 %v1907, %v1845
        %v1909 = vadd.f32 %v1908, %v1846
        %v1910 = vadd.f32 %v1909, %v1847
        %v1911 = vadd.f32 %v1910, %v1848
        %v1912 = vadd.f32 %v1911, %v1849
        %v1913 = vrot.slane %v1912, 4
        %v1914 = vadd.f32 %v1912, %v1913
        %v1915 = vrot.slane %v1914, 2
        %v1916 = vadd.f32 %v1914, %v1915
        %v1917 = vrot.slane %v1916, 1
        %v1918 = vadd.f32 %v1916, %v1917
        %v1919 = vadd.f32 %v1785, %v1918
        %1920 = vst [vmem:[#allocation5] sm:$0x1] %v1919
        %p1921 = scmp.eq.s32.totalorder %s27, 1
        // Predicated region
        $region53: #{tpu_custom_call.1} parent=35 // pred_check
          %p1922 = pneg %p1921
        $region54: #{tpu_custom_call.1} parent=35 // pred_check_branch
          %1924 = sbr.rel (%p1922) target = $region56
        $region55: #{tpu_custom_call.1} parent=35 // pred_region
          %v1925 = vld [vmem:[#allocation5] sm:$0x1]
          %v1926 = vld [vmem:[#allocation3] sm:$0x1]
          %v1927 = vsub.f32 %v1925, %v1926
          %v1928 = vld [vmem:[#allocation4] sm:$0x1]
          %v1929 = vlog2.pop %v1928
          %v1930 = vmul.f32 %v1929, 0.6931472
          %v1931 = vsub.f32 %v1927, %v1930
          %1932 = vst [vmem:[%s288] sm:$0x1] %v1931
        $region56: #{tpu_custom_call.1} parent=35 // pred_fallthru
          _
        %s1933 = sand.u32 %s141, 1
        %s1934 = scalar_lea.sflag [#allocation8], %s1933
        %s1935 = sand.u32 %s141, 1
        %s1936 = scalar_lea.vmem [#allocation12], %s1935
        // Predicated region
        $region57: #{tpu_custom_call.1} parent=35 // pred_check
          %p1937 = pneg %p151
        $region58: #{tpu_custom_call.1} parent=35 // pred_check_branch
          %1939 = sbr.rel (%p1937) target = $region60
        $region59: #{tpu_custom_call.1} parent=35 // pred_region
          %s1941 = ssub.s32 16, 16
          %1942 = vsyncadd %s1934, %s1941
          %s1943 = smul.addr %s26, 16
          %s1944 = scalar_lea.hbm %s4, %s1943
          %s1946 = sshll.u32 %s1936, 4
          %s1947 = int_to_ptr.vmem [resolvable:$true] %s1946
          %1949 = dma.vmem_to_hbm [thread:$0]  %s1947, 16, %s1944, %s1934
        $region60: #{tpu_custom_call.1} parent=35 // pred_fallthru
          _
      $region36: #{tpu_custom_call.1} parent=5 // pred_fallthru
        _
      %p1950 = scmp.le.s32.totalorder 2, %s17
      // Predicated region
      $region61: #{tpu_custom_call.1} parent=5 // pred_check
        %p1951 = pneg %p1950
      $region62: #{tpu_custom_call.1} parent=5 // pred_check_branch
        %1953 = sbr.rel (%p1951) target = $region64
      $region63: #{tpu_custom_call.1} parent=5 // pred_region
        %s1954 = ssub.s32 %s17, 2
        // Predicated region
        $region65: #{tpu_custom_call.1} parent=63 // pred_check
          %p1955 = pneg %p157
        $region66: #{tpu_custom_call.1} parent=63 // pred_check_branch
          %1957 = sbr.rel (%p1955) target = $region68
        $region67: #{tpu_custom_call.1} parent=63 // pred_region
          %s1958 = sand.u32 %s142, 1
          %s1959 = scalar_lea.sflag [#allocation8], %s1958
          %s1960 = sand.u32 %s142, 1
          %s1961 = scalar_lea.vmem [#allocation12], %s1960
          %1962 = dma.done %s1959, 16
        $region68: #{tpu_custom_call.1} parent=63 // pred_fallthru
          _
      $region64: #{tpu_custom_call.1} parent=5 // pred_fallthru
        _
    $region6: #{tpu_custom_call.1} parent=1 // loop_footer
      %s21 = sadd.s32 1, %s17
    $region7: #{tpu_custom_call.1} parent=1 // loop_footer_branch
      %16 = sbr.rel target = $region3
    $region8: #{tpu_custom_call.1} parent=1 // loop_exit
      _
    %1963 = vsyncpa [#allocation7], 1
    %s1964 = scalar_lea.sflag [#allocation7], 1
    %1965 = vsyncpa %s1964, 1
    %1966 = vsyncpa [#allocation10], 1
    %1967 = vsyncpa [#allocation8], 1
    %s1968 = scalar_lea.sflag [#allocation8], 1
    %1969 = vsyncpa %s1968, 1

</llo_original>
